<compile_context>
chip_gen: v6e
topology: v6e:2x2x1
jax: 0.10.0
libtpu: 0.0.40
codegen_flags: <defaults>
</compile_context>

<pallas_src>
import functools

import jax
import jax.numpy as jnp
from jax.experimental import pallas as pl
from jax.experimental.pallas import tpu as pltpu


def _round_up(x, m):
    return ((x + m - 1) // m) * m


def _cdiv(a, b):
    return -(-a // b)


def _vmem_capacity_bytes():
    try:
        info = pltpu.get_tpu_info()
        cap = getattr(info, "vmem_capacity_bytes", None)
        if cap:
            return int(cap)
    except Exception:
        pass
    return 64 * 1024 * 1024  # conservative fallback (v7x per-TensorCore VMEM)


def _layernorm_rows(z, gamma, beta, eps):
    """One-pass-moment LayerNorm over the last axis (f32 math)."""
    mean = jnp.mean(z, axis=-1, keepdims=True)
    mean_sq = jnp.mean(z * z, axis=-1, keepdims=True)
    var = jnp.maximum(mean_sq - mean * mean, 0.0)
    inv = jax.lax.rsqrt(var + eps)
    return (z - mean) * inv * gamma + beta


# --------------------------------------------------------------------------- #
# Kernel bodies
# --------------------------------------------------------------------------- #
def _ffn_resident_kernel(x_ref, w1_ref, b1_ref, w2_ref, b2_ref,
                         gamma_ref, beta_ref, o_ref, *, eps):
    """Resident-weights path: grid=(row_tiles,), full W1/W2 live in VMEM."""
    x = x_ref[...]                                                    # (tm, D)

    h = jnp.dot(x, w1_ref[...], preferred_element_type=jnp.float32)  # (tm, F)
    h = jnp.maximum(h + b1_ref[...].astype(jnp.float32), 0.0)

    # dropout: identity in eval mode.

    y = jnp.dot(h.astype(w2_ref.dtype), w2_ref[...],
                preferred_element_type=jnp.float32)                   # (tm, D)
    z = y + b2_ref[...].astype(jnp.float32) + x.astype(jnp.float32)   # residual

    out = _layernorm_rows(z,
                          gamma_ref[...].astype(jnp.float32),
                          beta_ref[...].astype(jnp.float32), eps)
    o_ref[...] = out.astype(o_ref.dtype)


def _ffn_chunked_kernel(x_ref, w1_ref, b1_ref, w2_ref, b2_ref,
                        gamma_ref, beta_ref, o_ref, acc_ref, *, eps):
    """F-chunked path: grid=(row_tiles, ff_chunks), f32 VMEM accumulator."""
    f = pl.program_id(1)
    n_f = pl.num_programs(1)

    x = x_ref[...]                                                    # (tm, D)

    h = jnp.dot(x, w1_ref[...], preferred_element_type=jnp.float32)  # (tm, tf)
    h = jnp.maximum(h + b1_ref[...].astype(jnp.float32), 0.0)

    part = jnp.dot(h.astype(w2_ref.dtype), w2_ref[...],
                   preferred_element_type=jnp.float32)                # (tm, D)

    @pl.when(f == 0)
    def _():
        acc_ref[...] = part            # direct write: no zero-init + RMW

    @pl.when(f > 0)
    def _():
        acc_ref[...] += part

    @pl.when(f == n_f - 1)
    def _():
        z = acc_ref[...] + b2_ref[...].astype(jnp.float32) + x.astype(jnp.float32)
        out = _layernorm_rows(z,
                              gamma_ref[...].astype(jnp.float32),
                              beta_ref[...].astype(jnp.float32), eps)
        o_ref[...] = out.astype(o_ref.dtype)


# --------------------------------------------------------------------------- #
# Wrapper
# --------------------------------------------------------------------------- #
def custom_feed_forward(x, w1, b1, w2, b2, gamma, beta, *, eps=1e-5,
                        tm=None, tf=None, compute_dtype=None,
                        resident_weights=None, min_row_tiles=2):
    """x: [B, S, D]; w1: [D, F]; b1: [F]; w2: [F, D]; b2/gamma/beta: [D].

    tm / tf:        row / hidden tile overrides (auto-selected per VMEM size if None).
    compute_dtype:  optional matmul-operand dtype (e.g. jnp.bfloat16); accumulation,
                    residual and LayerNorm stay f32.
    resident_weights: None = auto; False forces the F-chunked path; True requests
                    resident weights (honored only if they fit VMEM).
    """
    B, S, D = x.shape
    F_ = w1.shape[1]
    assert w1.shape == (D, F_) and w2.shape == (F_, D)
    assert b1.shape == (F_,) and b2.shape == (D,)

    out_dtype = x.dtype
    N = B * S
    x2 = x.reshape(N, D)

    if compute_dtype is not None:
        x2 = x2.astype(compute_dtype)
        w1 = w1.astype(compute_dtype)
        w2 = w2.astype(compute_dtype)

    xb = jnp.dtype(x2.dtype).itemsize
    ob = jnp.dtype(out_dtype).itemsize
    wb = jnp.dtype(w1.dtype).itemsize

    cap = _vmem_capacity_bytes()
    big_vmem = cap >= 96 * 1024 * 1024           # v5e/v6e (128 MiB) vs v7x (64 MiB)
    vmem_budget = int(0.8 * cap)                  # headroom for compiler scratch

    def _pick_tm(target):
        tmv = _round_up(min(target, _round_up(N, 8)), 8)
        # Keep >= min_row_tiles row tiles so v7x's two TensorCores both get work.
        while min_row_tiles > 1 and _cdiv(N, tmv) < min_row_tiles and tmv > 8:
            tmv = max(8, _round_up(tmv // 2, 8))
        # Prefer a divisor of N (avoids the jnp.pad HBM copy), but never shrink
        # below half the chosen tile just to avoid padding.
        if N % tmv != 0:
            for cand in range(tmv, max(8, tmv // 2) - 1, -8):
                if N % cand == 0:
                    tmv = cand
                    break
        return tmv

    def _resident_vmem(tmv):
        return (2 * tmv * D * xb                 # x tiles (double-buffered)
                + 2 * tmv * D * ob               # out tiles
                + 2 * (D * F_ + F_ * D) * wb     # W1 + W2 (count 2 buffers, safe)
                + tmv * F_ * 4                   # f32 hidden intermediate
                + 2 * (F_ + 3 * D) * 4)          # biases / gamma / beta

    def _chunked_vmem(tmv, tfv):
        return (2 * tmv * D * xb + 2 * tmv * D * ob
                + 2 * D * tfv * wb + 2 * tfv * D * wb
                + tmv * D * 4                    # f32 accumulator
                + tmv * tfv * 4                  # f32 hidden intermediate
                + 2 * (tfv + 3 * D) * 4)

    b2_2 = b2.reshape(1, D)
    gamma_2 = gamma.reshape(1, D)
    beta_2 = beta.reshape(1, D)

    # ---------------- resident-weights fast path ---------------- #
    tm_res = _pick_tm(tm if tm is not None else 512)
    while _resident_vmem(tm_res) > vmem_budget and tm_res > 64:
        tm_res = _round_up(tm_res // 2, 8)
    resident_fits = _resident_vmem(tm_res) <= vmem_budget
    use_resident = resident_fits if resident_weights is None \
        else (bool(resident_weights) and resident_fits)

    if use_resident:
        tm_eff = tm_res
        n_pad = _round_up(N, tm_eff)
        if n_pad != N:
            x2 = jnp.pad(x2, ((0, n_pad - N), (0, 0)))
        n_i = n_pad // tm_eff
        b1_2 = b1.reshape(1, F_)

        est = _resident_vmem(tm_eff)
        vmem_limit = int(min(vmem_budget, max(32 * 1024 * 1024, int(1.4 * est))))
        cost = pl.CostEstimate(
            flops=int(4 * n_pad * D * F_),
            transcendentals=int(n_pad),
            bytes_accessed=int(n_pad * D * (xb + ob)      # activations in + out
                               + 2 * D * F_ * wb          # weights streamed once
                               + (F_ + 3 * D) * 4))

        out = pl.pallas_call(
            functools.partial(_ffn_resident_kernel, eps=eps),
            out_shape=jax.ShapeDtypeStruct((n_pad, D), out_dtype),
            grid_spec=pltpu.PrefetchScalarGridSpec(
                num_scalar_prefetch=0,
                grid=(n_i,),
                in_specs=[
                    pl.BlockSpec((tm_eff, D), lambda i: (i, 0)),   # x tile
                    pl.BlockSpec((D, F_), lambda i: (0, 0)),       # W1 (resident)
                    pl.BlockSpec((1, F_), lambda i: (0, 0)),       # b1
                    pl.BlockSpec((F_, D), lambda i: (0, 0)),       # W2 (resident)
                    pl.BlockSpec((1, D), lambda i: (0, 0)),        # b2
                    pl.BlockSpec((1, D), lambda i: (0, 0)),        # gamma
                    pl.BlockSpec((1, D), lambda i: (0, 0)),        # beta
                ],
                out_specs=pl.BlockSpec((tm_eff, D), lambda i: (i, 0)),
            ),
            compiler_params=pltpu.CompilerParams(
                dimension_semantics=("parallel",),
                vmem_limit_bytes=vmem_limit),
            cost_estimate=cost,
        )(x2, w1, b1_2, w2, b2_2, gamma_2, beta_2)

        return out[:N].reshape(B, S, D)

    # ---------------- F-chunked fallback (huge D/F) ---------------- #
    tf_target = tf if tf is not None else (1024 if big_vmem else 512)
    tf_eff = _round_up(min(tf_target, _round_up(F_, 128)), 128)
    tm_eff = _pick_tm(tm if tm is not None else (768 if big_vmem else 448))
    while _chunked_vmem(tm_eff, tf_eff) > vmem_budget:
        if tf_eff > 128:
            tf_eff = _round_up(tf_eff // 2, 128)
        elif tm_eff > 64:
            tm_eff = _round_up(tm_eff // 2, 8)
        else:
            break

    n_pad = _round_up(N, tm_eff)
    if n_pad != N:
        x2 = jnp.pad(x2, ((0, n_pad - N), (0, 0)))
    f_pad = _round_up(F_, tf_eff)
    if f_pad != F_:                                   # zero chunks contribute 0
        w1 = jnp.pad(w1, ((0, 0), (0, f_pad - F_)))
        b1 = jnp.pad(b1, ((0, f_pad - F_),))
        w2 = jnp.pad(w2, ((0, f_pad - F_), (0, 0)))
    b1_2 = b1.reshape(1, f_pad)

    n_i = n_pad // tm_eff
    n_f = f_pad // tf_eff

    est = _chunked_vmem(tm_eff, tf_eff)
    vmem_limit = int(min(vmem_budget, max(32 * 1024 * 1024, int(1.4 * est))))
    cost = pl.CostEstimate(
        flops=int(4 * n_pad * D * f_pad),
        transcendentals=int(n_pad),
        bytes_accessed=int(n_pad * D * (xb + ob)
                           + n_i * 2 * D * f_pad * wb   # weights re-streamed / tile
                           + (f_pad + 3 * D) * 4))

    out = pl.pallas_call(
        functools.partial(_ffn_chunked_kernel, eps=eps),
        out_shape=jax.ShapeDtypeStruct((n_pad, D), out_dtype),
        grid_spec=pltpu.PrefetchScalarGridSpec(
            num_scalar_prefetch=0,
            grid=(n_i, n_f),
            in_specs=[
                pl.BlockSpec((tm_eff, D), lambda i, f: (i, 0)),    # x tile
                pl.BlockSpec((D, tf_eff), lambda i, f: (0, f)),    # W1 chunk
                pl.BlockSpec((1, tf_eff), lambda i, f: (0, f)),    # b1 chunk
                pl.BlockSpec((tf_eff, D), lambda i, f: (f, 0)),    # W2 chunk
                pl.BlockSpec((1, D), lambda i, f: (0, 0)),         # b2
                pl.BlockSpec((1, D), lambda i, f: (0, 0)),         # gamma
                pl.BlockSpec((1, D), lambda i, f: (0, 0)),         # beta
            ],
            out_specs=pl.BlockSpec((tm_eff, D), lambda i, f: (i, 0)),
            scratch_shapes=[pltpu.VMEM((tm_eff, D), jnp.float32)],
        ),
        compiler_params=pltpu.CompilerParams(
            dimension_semantics=("parallel", "arbitrary"),
            vmem_limit_bytes=vmem_limit),
        cost_estimate=cost,
    )(x2, w1, b1_2, w2, b2_2, gamma_2, beta_2)

    return out[:N].reshape(B, S, D)


def _reference(x, w1, b1, w2, b2, gamma, beta, eps=1e-5):
    h = jnp.maximum(x @ w1 + b1, 0.0)
    y = h @ w2 + b2
    z = y + x
    mean = jnp.mean(z, axis=-1, keepdims=True)
    var = jnp.mean((z - mean) ** 2, axis=-1, keepdims=True)
    return (z - mean) * jax.lax.rsqrt(var + eps) * gamma + beta


if __name__ == "__main__":
    B, S, D, F_ = 2, 128, 128, 512

    key = jax.random.PRNGKey(0)
    kx, k1, k2, k3, k4 = jax.random.split(key, 5)

    x = jax.random.normal(kx, (B, S, D), dtype=jnp.float32)

    # nn.Linear-style init (fc1: D->F, fc2: F->D); weights stored as [in, out].
    bound1 = 1.0 / (D ** 0.5)
    bound2 = 1.0 / (F_ ** 0.5)
    w1 = jax.random.uniform(k1, (D, F_), minval=-bound1, maxval=bound1, dtype=jnp.float32)
    b1 = jax.random.uniform(k2, (F_,), minval=-bound1, maxval=bound1, dtype=jnp.float32)
    w2 = jax.random.uniform(k3, (F_, D), minval=-bound2, maxval=bound2, dtype=jnp.float32)
    b2 = jax.random.uniform(k4, (D,), minval=-bound2, maxval=bound2, dtype=jnp.float32)
    gamma = jnp.ones((D,), dtype=jnp.float32)    # nn.LayerNorm default weight
    beta = jnp.zeros((D,), dtype=jnp.float32)    # nn.LayerNorm default bias

    ref = _reference(x, w1, b1, w2, b2, gamma, beta)

    # 1) Auto config: resident-weights fast path (weights easily fit in VMEM).
    out = jax.block_until_ready(custom_feed_forward(x, w1, b1, w2, b2, gamma, beta))
    assert out.shape == (B, S, D)
    assert jnp.allclose(out, ref, atol=5e-4, rtol=5e-4), "mismatch (resident path)"

    # 2) Forced F-chunked path with small tiles: exercises multi-step accumulation,
    #    the first-step direct write, and the fused residual+LayerNorm epilogue.
    out2 = jax.block_until_ready(
        custom_feed_forward(x, w1, b1, w2, b2, gamma, beta,
                            resident_weights=False, tm=64, tf=128))
    assert jnp.allclose(out2, ref, atol=5e-4, rtol=5e-4), "mismatch (chunked path)"

    # 3) bf16 matmul operands with f32 accumulation / LayerNorm (recommended
    #    production config); looser tolerance for bf16 operand quantization.
    out3 = jax.block_until_ready(
        custom_feed_forward(x, w1, b1, w2, b2, gamma, beta,
                            compute_dtype=jnp.bfloat16))
    assert jnp.allclose(out3, ref, atol=1.5e-1, rtol=5e-2), "mismatch (bf16 operands)"

    print("KERNEL_OK")
</pallas_src>

<mosaic_0001>
module attributes {stable_mosaic.version = 11 : i64} {
  func.func @_ffn_resident_kernel(%arg0: i32, %arg1: memref<128x128xf32, #tpu.memory_space<vmem>>, %arg2: memref<128x512xf32, #tpu.memory_space<vmem>>, %arg3: memref<1x512xf32, #tpu.memory_space<vmem>>, %arg4: memref<512x128xf32, #tpu.memory_space<vmem>>, %arg5: memref<1x128xf32, #tpu.memory_space<vmem>>, %arg6: memref<1x128xf32, #tpu.memory_space<vmem>>, %arg7: memref<1x128xf32, #tpu.memory_space<vmem>>, %arg8: memref<128x128xf32, #tpu.memory_space<vmem>>) attributes {dimension_semantics = [#tpu.dimension_semantics<parallel>], iteration_bounds = array<i64: 2>, scalar_prefetch = 0 : i64, scratch_operands = 0 : i64, tpu.core_type = #tpu.core_type<tc>, window_params = [{transform_indices = @transform_0, window_bounds = array<i64: 128, 128>}, {pipeline_mode = #tpu.pipeline_mode<synchronous>, transform_indices = @transform_1, window_bounds = array<i64: 128, 512>}, {pipeline_mode = #tpu.pipeline_mode<synchronous>, transform_indices = @transform_2, window_bounds = array<i64: 1, 512>}, {pipeline_mode = #tpu.pipeline_mode<synchronous>, transform_indices = @transform_3, window_bounds = array<i64: 512, 128>}, {pipeline_mode = #tpu.pipeline_mode<synchronous>, transform_indices = @transform_4, window_bounds = array<i64: 1, 128>}, {pipeline_mode = #tpu.pipeline_mode<synchronous>, transform_indices = @transform_5, window_bounds = array<i64: 1, 128>}, {pipeline_mode = #tpu.pipeline_mode<synchronous>, transform_indices = @transform_6, window_bounds = array<i64: 1, 128>}, {transform_indices = @transform_7, window_bounds = array<i64: 128, 128>}]} {
    %c0 = arith.constant 0 : index
    %c0_0 = arith.constant 0 : index
    %0 = vector.load %arg1[%c0, %c0_0] : memref<128x128xf32, #tpu.memory_space<vmem>>, vector<128x128xf32>
    %c0_1 = arith.constant 0 : index
    %c0_2 = arith.constant 0 : index
    %1 = vector.load %arg2[%c0_1, %c0_2] : memref<128x512xf32, #tpu.memory_space<vmem>>, vector<128x512xf32>
    %cst = arith.constant dense<0.000000e+00> : vector<128x512xf32>
    %2 = tpu.matmul %0, %1, %cst {dimension_numbers = #tpu.dot_dimension_numbers<[1], [0], [0], [1], [0, 0, 1, 1], [], []>} : vector<128x128xf32>, vector<128x512xf32>, vector<128x512xf32> -> vector<128x512xf32>
    %c0_3 = arith.constant 0 : index
    %c0_4 = arith.constant 0 : index
    %3 = vector.load %arg3[%c0_3, %c0_4] : memref<1x512xf32, #tpu.memory_space<vmem>>, vector<1x512xf32>
    %4 = vector.broadcast %3 : vector<1x512xf32> to vector<128x512xf32>
    %5 = arith.addf %2, %4 : vector<128x512xf32>
    %cst_5 = arith.constant 0.000000e+00 : f32
    %6 = vector.broadcast %cst_5 : f32 to vector<128x512xf32>
    %7 = arith.maximumf %5, %6 : vector<128x512xf32>
    %c0_6 = arith.constant 0 : index
    %c0_7 = arith.constant 0 : index
    %8 = vector.load %arg4[%c0_6, %c0_7] : memref<512x128xf32, #tpu.memory_space<vmem>>, vector<512x128xf32>
    %cst_8 = arith.constant dense<0.000000e+00> : vector<128x128xf32>
    %9 = tpu.matmul %7, %8, %cst_8 {dimension_numbers = #tpu.dot_dimension_numbers<[1], [0], [0], [1], [0, 0, 1, 1], [], []>} : vector<128x512xf32>, vector<512x128xf32>, vector<128x128xf32> -> vector<128x128xf32>
    %c0_9 = arith.constant 0 : index
    %c0_10 = arith.constant 0 : index
    %10 = vector.load %arg5[%c0_9, %c0_10] : memref<1x128xf32, #tpu.memory_space<vmem>>, vector<1x128xf32>
    %11 = vector.broadcast %10 : vector<1x128xf32> to vector<128x128xf32>
    %12 = arith.addf %9, %11 : vector<128x128xf32>
    %13 = arith.addf %12, %0 : vector<128x128xf32>
    %c0_11 = arith.constant 0 : index
    %c0_12 = arith.constant 0 : index
    %14 = vector.load %arg6[%c0_11, %c0_12] : memref<1x128xf32, #tpu.memory_space<vmem>>, vector<1x128xf32>
    %c0_13 = arith.constant 0 : index
    %c0_14 = arith.constant 0 : index
    %15 = vector.load %arg7[%c0_13, %c0_14] : memref<1x128xf32, #tpu.memory_space<vmem>>, vector<1x128xf32>
    %cst_15 = arith.constant dense<0.000000e+00> : vector<128xf32>
    %16 = vector.multi_reduction <add>, %13, %cst_15 [1] : vector<128x128xf32> to vector<128xf32>
    %17 = vector.shape_cast %16 : vector<128xf32> to vector<128x1xf32>
    %cst_16 = arith.constant 1.280000e+02 : f32
    %18 = vector.broadcast %cst_16 : f32 to vector<128x1xf32>
    %19 = arith.divf %17, %18 : vector<128x1xf32>
    %20 = arith.mulf %13, %13 : vector<128x128xf32>
    %cst_17 = arith.constant dense<0.000000e+00> : vector<128xf32>
    %21 = vector.multi_reduction <add>, %20, %cst_17 [1] : vector<128x128xf32> to vector<128xf32>
    %22 = vector.shape_cast %21 : vector<128xf32> to vector<128x1xf32>
    %cst_18 = arith.constant 1.280000e+02 : f32
    %23 = vector.broadcast %cst_18 : f32 to vector<128x1xf32>
    %24 = arith.divf %22, %23 : vector<128x1xf32>
    %25 = arith.mulf %19, %19 : vector<128x1xf32>
    %26 = arith.subf %24, %25 : vector<128x1xf32>
    %cst_19 = arith.constant 0.000000e+00 : f32
    %27 = vector.broadcast %cst_19 : f32 to vector<128x1xf32>
    %28 = arith.maximumf %26, %27 : vector<128x1xf32>
    %cst_20 = arith.constant 9.99999974E-6 : f32
    %29 = vector.broadcast %cst_20 : f32 to vector<128x1xf32>
    %30 = arith.addf %28, %29 : vector<128x1xf32>
    %31 = math.rsqrt %30 : vector<128x1xf32>
    %32 = vector.broadcast %19 : vector<128x1xf32> to vector<128x128xf32>
    %33 = arith.subf %13, %32 : vector<128x128xf32>
    %34 = vector.broadcast %31 : vector<128x1xf32> to vector<128x128xf32>
    %35 = arith.mulf %33, %34 : vector<128x128xf32>
    %36 = vector.broadcast %14 : vector<1x128xf32> to vector<128x128xf32>
    %37 = arith.mulf %35, %36 : vector<128x128xf32>
    %38 = vector.broadcast %15 : vector<1x128xf32> to vector<128x128xf32>
    %39 = arith.addf %37, %38 : vector<128x128xf32>
    %c0_21 = arith.constant 0 : index
    %c0_22 = arith.constant 0 : index
    %40 = vector.load %arg8[%c0_21, %c0_22] : memref<128x128xf32, #tpu.memory_space<vmem>>, vector<128x128xf32>
    tpu.vector_store %arg8[%c0_21, %c0_22], %39 {strides = array<i32>} : memref<128x128xf32, #tpu.memory_space<vmem>>, vector<128x128xf32>,
    return
  }
  func.func @transform_0(%arg0: i32) -> (i32, i32) {
    %c0_i32 = arith.constant 0 : i32
    %c0_i32_0 = arith.constant 0 : i32
    return %arg0, %c0_i32 : i32, i32
  }
  func.func @transform_1(%arg0: i32) -> (i32, i32) {
    %c0_i32 = arith.constant 0 : i32
    %c0_i32_0 = arith.constant 0 : i32
    %c0_i32_1 = arith.constant 0 : i32
    return %c0_i32, %c0_i32_0 : i32, i32
  }
  func.func @transform_2(%arg0: i32) -> (i32, i32) {
    %c0_i32 = arith.constant 0 : i32
    %c0_i32_0 = arith.constant 0 : i32
    %c0_i32_1 = arith.constant 0 : i32
    return %c0_i32, %c0_i32_0 : i32, i32
  }
  func.func @transform_3(%arg0: i32) -> (i32, i32) {
    %c0_i32 = arith.constant 0 : i32
    %c0_i32_0 = arith.constant 0 : i32
    %c0_i32_1 = arith.constant 0 : i32
    return %c0_i32, %c0_i32_0 : i32, i32
  }
  func.func @transform_4(%arg0: i32) -> (i32, i32) {
    %c0_i32 = arith.constant 0 : i32
    %c0_i32_0 = arith.constant 0 : i32
    %c0_i32_1 = arith.constant 0 : i32
    return %c0_i32, %c0_i32_0 : i32, i32
  }
  func.func @transform_5(%arg0: i32) -> (i32, i32) {
    %c0_i32 = arith.constant 0 : i32
    %c0_i32_0 = arith.constant 0 : i32
    %c0_i32_1 = arith.constant 0 : i32
    return %c0_i32, %c0_i32_0 : i32, i32
  }
  func.func @transform_6(%arg0: i32) -> (i32, i32) {
    %c0_i32 = arith.constant 0 : i32
    %c0_i32_0 = arith.constant 0 : i32
    %c0_i32_1 = arith.constant 0 : i32
    return %c0_i32, %c0_i32_0 : i32, i32
  }
  func.func @transform_7(%arg0: i32) -> (i32, i32) {
    %c0_i32 = arith.constant 0 : i32
    %c0_i32_0 = arith.constant 0 : i32
    return %arg0, %c0_i32 : i32, i32
  }
}

</mosaic_0001>

<llo_original>
// kernel: tpu_custom_call.1
$region0: #{tpu_custom_call.1}
  #allocation0 [shape = 'u32[]', space=smem, size = 0x4, offset = 0x4, fixed_abs, tag = 'smem constant byte address 0x4 - core index']
  #allocation1 [shape = 'u32[144,128]{1,0:T(1,128)}', space=vmem, size = 0x12000, scoped, tag = 'internal scratch']
  %s0 = inlined_call_operand.hbm [shape: f32[256,128], index: 0, kind: input, shape index: {}]
  %s1 = inlined_call_operand.hbm [shape: f32[128,512], index: 1, kind: input, shape index: {}]
  %s2 = inlined_call_operand.hbm [shape: f32[1,512], index: 2, kind: input, shape index: {}]
  %s3 = inlined_call_operand.hbm [shape: f32[512,128], index: 3, kind: input, shape index: {}]
  %s4 = inlined_call_operand.vmem [shape: f32[1,128], index: 4, kind: input, shape index: {}]
  %s5 = inlined_call_operand.vmem [shape: f32[1,128], index: 5, kind: input, shape index: {}]
  %s6 = inlined_call_operand.vmem [shape: f32[1,128], index: 6, kind: input, shape index: {}]
  %s7 = inlined_call_operand.hbm [shape: f32[256,128], index: 7, kind: output, shape index: {}]
  %s8 = sld [smem:[#allocation0]]
  $region77: #{tpu_custom_call.1} parent=0
    _
  %s10 = ssub.s32 1, %s8
  %s11 = scalar_select 0, %s10, %s8
  $region1: #{tpu_custom_call.1} parent=0
    #allocation2 [shape = 'u8[131072]{0}', space=vmem, size = 0x20000, scoped, tag = 'input window, operand 0']
    #allocation3 [shape = 's32[2]{0}', space=sflag, size = 0x8, scoped, tag = 'scoped memory for tpu_custom_call.1']
    #allocation4 [shape = 's32[2]{0}', space=sflag, size = 0x8, scoped, tag = 'scoped memory for tpu_custom_call.1']
    #allocation5 [shape = 'u8[262144]{0}', space=vmem, size = 0x40000, scoped, tag = 'input window, operand 1, single buffered']
    #allocation6 [shape = 's32[1]{0}', space=sflag, size = 0x4, scoped, tag = 'scoped memory for tpu_custom_call.1']
    #allocation7 [shape = 'u8[2048]{0}', space=vmem, size = 0x800, scoped, tag = 'input window, operand 2, single buffered']
    #allocation8 [shape = 'u8[262144]{0}', space=vmem, size = 0x40000, scoped, tag = 'input window, operand 3, single buffered']
    #allocation9 [shape = 's32[1]{0}', space=sflag, size = 0x4, scoped, tag = 'scoped memory for tpu_custom_call.1']
    #allocation10 [shape = 'u8[131072]{0}', space=vmem, size = 0x20000, scoped, tag = 'output window, operand 0']
    %12 = vsyncpa [#allocation3], 0
    %s13 = scalar_lea.sflag [#allocation3], 1
    %14 = vsyncpa %s13, 0
    %15 = vsyncpa [#allocation6], 0
    %16 = vsyncpa [#allocation9], 0
    %17 = vsyncpa [#allocation4], 0
    %s18 = scalar_lea.sflag [#allocation4], 1
    %19 = vsyncpa %s18, 0
    loop: start=0, step=1, limit=4
    $region2: #{tpu_custom_call.1} parent=1 // loop_pre_header
      _
    $region3: #{tpu_custom_call.1} parent=1 // loop_header
      %s21 = sphi 0, %s25
      %p22 = scmp.ge.s32.totalorder %s21, 4
      %s31 = sphi 0, %s33
      %s34 = sphi 0, %s31
      %s35 = sphi 0, %s34
      %s51 = sphi 0, %s35
      %s55 = sphi 0, %s55
      %s57 = sphi 0, %s55
      %s58 = sphi 0, %s57
      %s72 = sphi 0, %s58
      %s76 = sphi 0, %s76
      %s78 = sphi 0, %s76
      %s79 = sphi 0, %s78
      %s93 = sphi 0, %s79
      %s97 = sphi 0, %s97
      %s99 = sphi 0, %s97
      %s100 = sphi 0, %s99
      %s114 = sphi 0, %s100
      %s118 = sphi 0, %s118
      %s120 = sphi 0, %s118
      %s121 = sphi 0, %s120
      %s135 = sphi 0, %s121
      %s139 = sphi 0, %s139
      %s141 = sphi 0, %s139
      %s142 = sphi 0, %s141
      %s156 = sphi 0, %s142
      %s160 = sphi 0, %s160
      %s162 = sphi 0, %s160
      %s163 = sphi 0, %s162
      %s177 = sphi 0, %s163
      %s183 = sphi 0, %s185
      %s186 = sphi 0, %s183
      %s187 = sphi 0, %s186
      %s203 = sphi 0, %s187
    $region4: #{tpu_custom_call.1} parent=1 // loop_header_branch
      %24 = sbr.rel (%p22) target = $region8
    $region5: #{tpu_custom_call.1} parent=1 // loop_body
      %s26 = ssub.s32 %s21, 1
      %s27 = ssub.s32 %s21, 2
      %s28 = sadd.s32 %s21, 1
      %s29 = ssub.s32 %s21, %s28
      %p30 = scmp.eq.s32.totalorder %s29, 0
      %s32 = sadd.s32 %s31, 1
      %s33 = scalar_select %p30, %s31, %s32
      %p36 = pneg %p30
      %p37 = scmp.eq.s32.totalorder %s21, 1
      %p38 = por %p36, %p37
      %p39 = scmp.ne.s32.totalorder %s31, %s34
      %p40 = scmp.eq.s32.totalorder %s21, 0
      %p41 = por %p39, %p40
      %p42 = scmp.ne.s32.totalorder %s31, %s34
      %p43 = scmp.eq.s32.totalorder %s26, 1
      %p44 = por %p42, %p43
      %p45 = scmp.ne.s32.totalorder %s34, %s35
      %p46 = scmp.eq.s32.totalorder %s26, 0
      %p47 = por %p45, %p46
      %p48 = scmp.ne.s32.totalorder %s34, %s35
      %p49 = scmp.eq.s32.totalorder %s27, 1
      %p50 = por %p48, %p49
      %p52 = scmp.ne.s32.totalorder %s35, %s51
      %p53 = scmp.eq.s32.totalorder %s27, 0
      %p54 = por %p52, %p53
      %s56 = sadd.s32 %s55, 1
      %p59 = scmp.eq.s32.totalorder %s21, 1
      %p60 = scmp.ne.s32.totalorder %s55, %s57
      %p61 = scmp.eq.s32.totalorder %s21, 0
      %p62 = por %p60, %p61
      %p63 = scmp.ne.s32.totalorder %s55, %s57
      %p64 = scmp.eq.s32.totalorder %s26, 1
      %p65 = por %p63, %p64
      %p66 = scmp.ne.s32.totalorder %s57, %s58
      %p67 = scmp.eq.s32.totalorder %s26, 0
      %p68 = por %p66, %p67
      %p69 = scmp.ne.s32.totalorder %s57, %s58
      %p70 = scmp.eq.s32.totalorder %s27, 1
      %p71 = por %p69, %p70
      %p73 = scmp.ne.s32.totalorder %s58, %s72
      %p74 = scmp.eq.s32.totalorder %s27, 0
      %p75 = por %p73, %p74
      %s77 = sadd.s32 %s76, 1
      %p80 = scmp.eq.s32.totalorder %s21, 1
      %p81 = scmp.ne.s32.totalorder %s76, %s78
      %p82 = scmp.eq.s32.totalorder %s21, 0
      %p83 = por %p81, %p82
      %p84 = scmp.ne.s32.totalorder %s76, %s78
      %p85 = scmp.eq.s32.totalorder %s26, 1
      %p86 = por %p84, %p85
      %p87 = scmp.ne.s32.totalorder %s78, %s79
      %p88 = scmp.eq.s32.totalorder %s26, 0
      %p89 = por %p87, %p88
      %p90 = scmp.ne.s32.totalorder %s78, %s79
      %p91 = scmp.eq.s32.totalorder %s27, 1
      %p92 = por %p90, %p91
      %p94 = scmp.ne.s32.totalorder %s79, %s93
      %p95 = scmp.eq.s32.totalorder %s27, 0
      %p96 = por %p94, %p95
      %s98 = sadd.s32 %s97, 1
      %p101 = scmp.eq.s32.totalorder %s21, 1
      %p102 = scmp.ne.s32.totalorder %s97, %s99
      %p103 = scmp.eq.s32.totalorder %s21, 0
      %p104 = por %p102, %p103
      %p105 = scmp.ne.s32.totalorder %s97, %s99
      %p106 = scmp.eq.s32.totalorder %s26, 1
      %p107 = por %p105, %p106
      %p108 = scmp.ne.s32.totalorder %s99, %s100
      %p109 = scmp.eq.s32.totalorder %s26, 0
      %p110 = por %p108, %p109
      %p111 = scmp.ne.s32.totalorder %s99, %s100
      %p112 = scmp.eq.s32.totalorder %s27, 1
      %p113 = por %p111, %p112
      %p115 = scmp.ne.s32.totalorder %s100, %s114
      %p116 = scmp.eq.s32.totalorder %s27, 0
      %p117 = por %p115, %p116
      %s119 = sadd.s32 %s118, 1
      %p122 = scmp.eq.s32.totalorder %s21, 1
      %p123 = scmp.ne.s32.totalorder %s118, %s120
      %p124 = scmp.eq.s32.totalorder %s21, 0
      %p125 = por %p123, %p124
      %p126 = scmp.ne.s32.totalorder %s118, %s120
      %p127 = scmp.eq.s32.totalorder %s26, 1
      %p128 = por %p126, %p127
      %p129 = scmp.ne.s32.totalorder %s120, %s121
      %p130 = scmp.eq.s32.totalorder %s26, 0
      %p131 = por %p129, %p130
      %p132 = scmp.ne.s32.totalorder %s120, %s121
      %p133 = scmp.eq.s32.totalorder %s27, 1
      %p134 = por %p132, %p133
      %p136 = scmp.ne.s32.totalorder %s121, %s135
      %p137 = scmp.eq.s32.totalorder %s27, 0
      %p138 = por %p136, %p137
      %s140 = sadd.s32 %s139, 1
      %p143 = scmp.eq.s32.totalorder %s21, 1
      %p144 = scmp.ne.s32.totalorder %s139, %s141
      %p145 = scmp.eq.s32.totalorder %s21, 0
      %p146 = por %p144, %p145
      %p147 = scmp.ne.s32.totalorder %s139, %s141
      %p148 = scmp.eq.s32.totalorder %s26, 1
      %p149 = por %p147, %p148
      %p150 = scmp.ne.s32.totalorder %s141, %s142
      %p151 = scmp.eq.s32.totalorder %s26, 0
      %p152 = por %p150, %p151
      %p153 = scmp.ne.s32.totalorder %s141, %s142
      %p154 = scmp.eq.s32.totalorder %s27, 1
      %p155 = por %p153, %p154
      %p157 = scmp.ne.s32.totalorder %s142, %s156
      %p158 = scmp.eq.s32.totalorder %s27, 0
      %p159 = por %p157, %p158
      %s161 = sadd.s32 %s160, 1
      %p164 = scmp.eq.s32.totalorder %s21, 1
      %p165 = scmp.ne.s32.totalorder %s160, %s162
      %p166 = scmp.eq.s32.totalorder %s21, 0
      %p167 = por %p165, %p166
      %p168 = scmp.ne.s32.totalorder %s160, %s162
      %p169 = scmp.eq.s32.totalorder %s26, 1
      %p170 = por %p168, %p169
      %p171 = scmp.ne.s32.totalorder %s162, %s163
      %p172 = scmp.eq.s32.totalorder %s26, 0
      %p173 = por %p171, %p172
      %p174 = scmp.ne.s32.totalorder %s162, %s163
      %p175 = scmp.eq.s32.totalorder %s27, 1
      %p176 = por %p174, %p175
      %p178 = scmp.ne.s32.totalorder %s163, %s177
      %p179 = scmp.eq.s32.totalorder %s27, 0
      %p180 = por %p178, %p179
      %s181 = ssub.s32 %s21, %s28
      %p182 = scmp.eq.s32.totalorder %s181, 0
      %s184 = sadd.s32 %s183, 1
      %s185 = scalar_select %p182, %s183, %s184
      %p188 = pneg %p182
      %p189 = scmp.eq.s32.totalorder %s21, 1
      %p190 = por %p188, %p189
      %p191 = scmp.ne.s32.totalorder %s183, %s186
      %p192 = scmp.eq.s32.totalorder %s21, 0
      %p193 = por %p191, %p192
      %p194 = scmp.ne.s32.totalorder %s183, %s186
      %p195 = scmp.eq.s32.totalorder %s26, 1
      %p196 = por %p194, %p195
      %p197 = scmp.ne.s32.totalorder %s186, %s187
      %p198 = scmp.eq.s32.totalorder %s26, 0
      %p199 = por %p197, %p198
      %p200 = scmp.ne.s32.totalorder %s186, %s187
      %p201 = scmp.eq.s32.totalorder %s27, 1
      %p202 = por %p200, %p201
      %p204 = scmp.ne.s32.totalorder %s187, %s203
      %p205 = scmp.eq.s32.totalorder %s27, 0
      %p206 = por %p204, %p205
      %p207 = scmp.le.s32.totalorder 1, %s21
      %p208 = scmp.lt.s32.totalorder %s21, 3
      %p209 = pnand %p207, %p208
      %p210 = pneg %p209
      // Predicated region
      $region9: #{tpu_custom_call.1} parent=5 // pred_check
        _
      $region10: #{tpu_custom_call.1} parent=5 // pred_check_branch
        %212 = sbr.rel (%p209) target = $region12
      $region11: #{tpu_custom_call.1} parent=5 // pred_region
        %s213 = ssub.s32 %s21, 1
        // Predicated region
        $region13: #{tpu_custom_call.1} parent=11 // pred_check
          %p214 = pneg %p68
        $region14: #{tpu_custom_call.1} parent=11 // pred_check_branch
          %216 = sbr.rel (%p214) target = $region16
        $region15: #{tpu_custom_call.1} parent=11 // pred_region
          %s218 = ssub.s32 8192, 8192
          %219 = vsyncadd [#allocation6], %s218
          %s220 = sshll.u32 [#allocation5], 4
          %s221 = int_to_ptr.vmem [resolvable:$true] %s220
          %226 = dma.hbm_to_vmem [thread:$0]  %s1, 8192, %s221, [#allocation6], 512, 512, 32
        $region16: #{tpu_custom_call.1} parent=11 // pred_fallthru
          _
        // Predicated region
        $region17: #{tpu_custom_call.1} parent=11 // pred_check
          %p227 = pneg %p89
        $region18: #{tpu_custom_call.1} parent=11 // pred_check_branch
          %229 = sbr.rel (%p227) target = $region20
        $region19: #{tpu_custom_call.1} parent=11 // pred_region
          %s231 = ssub.s32 64, 64
          %232 = vsyncadd [#allocation6], %s231
          %s234 = sshll.u32 [#allocation7], 4
          %s235 = int_to_ptr.vmem [resolvable:$true] %s234
          %237 = dma.hbm_to_vmem [thread:$0]  %s2, 64, %s235, [#allocation6]
        $region20: #{tpu_custom_call.1} parent=11 // pred_fallthru
          _
        // Predicated region
        $region21: #{tpu_custom_call.1} parent=11 // pred_check
          %p238 = pneg %p110
        $region22: #{tpu_custom_call.1} parent=11 // pred_check_branch
          %240 = sbr.rel (%p238) target = $region24
        $region23: #{tpu_custom_call.1} parent=11 // pred_region
          %s242 = ssub.s32 8192, 8192
          %243 = vsyncadd [#allocation9], %s242
          %s244 = sshll.u32 [#allocation8], 4
          %s245 = int_to_ptr.vmem [resolvable:$true] %s244
          %250 = dma.hbm_to_vmem [thread:$0]  %s3, 8192, %s245, [#allocation9], 128, 128, 8
        $region24: #{tpu_custom_call.1} parent=11 // pred_fallthru
          _
        // Predicated region
        $region25: #{tpu_custom_call.1} parent=11 // pred_check
          %p251 = pneg %p131
        $region26: #{tpu_custom_call.1} parent=11 // pred_check_branch
          %253 = sbr.rel (%p251) target = $region28
        $region27: #{tpu_custom_call.1} parent=11 // pred_region
          _
        $region28: #{tpu_custom_call.1} parent=11 // pred_fallthru
          _
        // Predicated region
        $region29: #{tpu_custom_call.1} parent=11 // pred_check
          %p254 = pneg %p152
        $region30: #{tpu_custom_call.1} parent=11 // pred_check_branch
          %256 = sbr.rel (%p254) target = $region32
        $region31: #{tpu_custom_call.1} parent=11 // pred_region
          _
        $region32: #{tpu_custom_call.1} parent=11 // pred_fallthru
          _
        // Predicated region
        $region33: #{tpu_custom_call.1} parent=11 // pred_check
          %p257 = pneg %p173
        $region34: #{tpu_custom_call.1} parent=11 // pred_check_branch
          %259 = sbr.rel (%p257) target = $region36
        $region35: #{tpu_custom_call.1} parent=11 // pred_region
          _
        $region36: #{tpu_custom_call.1} parent=11 // pred_fallthru
          _
      $region12: #{tpu_custom_call.1} parent=5 // pred_fallthru
        _
      %p260 = scmp.lt.s32.totalorder %s21, 2
      // Predicated region
      $region37: #{tpu_custom_call.1} parent=5 // pred_check
        %p261 = pneg %p260
      $region38: #{tpu_custom_call.1} parent=5 // pred_check_branch
        %263 = sbr.rel (%p261) target = $region40
      $region39: #{tpu_custom_call.1} parent=5 // pred_region
        // Predicated region
        $region41: #{tpu_custom_call.1} parent=39 // pred_check
          %p264 = pneg %p41
        $region42: #{tpu_custom_call.1} parent=39 // pred_check_branch
          %266 = sbr.rel (%p264) target = $region44
        $region43: #{tpu_custom_call.1} parent=39 // pred_region
          %s267 = sand.u32 %s31, 1
          %s268 = scalar_lea.sflag [#allocation3], %s267
          %s269 = sand.u32 %s31, 1
          %s270 = smul.addr %s269, 128
          %s271 = scalar_lea.vmem [#allocation2], %s270
          %s272 = smul.u32 16, %s21
          %s274 = ssub.s32 2048, 2048
          %275 = vsyncadd %s268, %s274
          %s276 = smul.addr %s272, 128
          %s277 = scalar_lea.hbm %s0, %s276
          %s278 = sshll.u32 %s271, 4
          %s279 = int_to_ptr.vmem [resolvable:$true] %s278
          %284 = dma.hbm_to_vmem [thread:$0]  %s277, 2048, %s279, %s268, 128, 128, 8
        $region44: #{tpu_custom_call.1} parent=39 // pred_fallthru
          _
      $region40: #{tpu_custom_call.1} parent=5 // pred_fallthru
        _
      %p285 = scmp.le.s32.totalorder 1, %s21
      %p286 = scmp.lt.s32.totalorder %s21, 3
      %p287 = pnand %p285, %p286
      %p288 = pneg %p287
      // Predicated region
      $region45: #{tpu_custom_call.1} parent=5 // pred_check
        _
      $region46: #{tpu_custom_call.1} parent=5 // pred_check_branch
        %290 = sbr.rel (%p287) target = $region48
      $region47: #{tpu_custom_call.1} parent=5 // pred_region
        %s291 = ssub.s32 %s21, 1
        %s292 = sand.u32 %s34, 1
        %s293 = scalar_lea.sflag [#allocation3], %s292
        %s294 = sand.u32 %s34, 1
        %s295 = smul.addr %s294, 128
        %s296 = scalar_lea.vmem [#allocation2], %s295
        // Predicated region
        $region49: #{tpu_custom_call.1} parent=47 // pred_check
          %p297 = pneg %p47
        $region50: #{tpu_custom_call.1} parent=47 // pred_check_branch
          %299 = sbr.rel (%p297) target = $region52
        $region51: #{tpu_custom_call.1} parent=47 // pred_region
          %300 = dma.done %s293, 2048
        $region52: #{tpu_custom_call.1} parent=47 // pred_fallthru
          _
        // Predicated region
        $region53: #{tpu_custom_call.1} parent=47 // pred_check
          %p301 = pneg %p68
        $region54: #{tpu_custom_call.1} parent=47 // pred_check_branch
          %303 = sbr.rel (%p301) target = $region56
        $region55: #{tpu_custom_call.1} parent=47 // pred_region
          %304 = dma.done [#allocation6], 8192
        $region56: #{tpu_custom_call.1} parent=47 // pred_fallthru
          _
        // Predicated region
        $region57: #{tpu_custom_call.1} parent=47 // pred_check
          %p305 = pneg %p89
        $region58: #{tpu_custom_call.1} parent=47 // pred_check_branch
          %307 = sbr.rel (%p305) target = $region60
        $region59: #{tpu_custom_call.1} parent=47 // pred_region
          %308 = dma.done [#allocation6], 64
        $region60: #{tpu_custom_call.1} parent=47 // pred_fallthru
          _
        // Predicated region
        $region61: #{tpu_custom_call.1} parent=47 // pred_check
          %p309 = pneg %p110
        $region62: #{tpu_custom_call.1} parent=47 // pred_check_branch
          %311 = sbr.rel (%p309) target = $region64
        $region63: #{tpu_custom_call.1} parent=47 // pred_region
          %312 = dma.done [#allocation9], 8192
        $region64: #{tpu_custom_call.1} parent=47 // pred_fallthru
          _
        %s313 = sand.u32 %s34, 1
        %s314 = scalar_lea.sflag [#allocation3], %s313
        %s315 = sand.u32 %s34, 1
        %s316 = smul.addr %s315, 128
        %s317 = scalar_lea.vmem [#allocation2], %s316
        %p318 = pneg %p47
        %p319 = pneg %p44
        %p320 = pneg %p68
        %p321 = pneg %p65
        %p322 = pneg %p89
        %p323 = pneg %p86
        %p324 = pneg %p110
        %p325 = pneg %p107
        %p326 = pneg %p131
        %p327 = pneg %p128
        %p328 = pneg %p152
        %p329 = pneg %p149
        %p330 = pneg %p173
        %p331 = pneg %p170
        %p332 = pneg %p199
        %p333 = pneg %p196
        %s334 = sand.u32 %s186, 1
        %s335 = scalar_lea.sflag [#allocation4], %s334
        %s336 = sand.u32 %s186, 1
        %s337 = smul.addr %s336, 128
        %s338 = scalar_lea.vmem [#allocation10], %s337
        %s339 = smul.u32 16, %s26
        %s340 = smul.u32 16, %s26
        %v341 = vld [vmem:[%s296] sm:$0xff]
        %v342 = vld [vmem:[%s296 + $0x8] sm:$0xff]
        %v343 = vld [vmem:[%s296 + $0x10] sm:$0xff]
        %v344 = vld [vmem:[%s296 + $0x18] sm:$0xff]
        %v345 = vld [vmem:[%s296 + $0x20] sm:$0xff]
        %v346 = vld [vmem:[%s296 + $0x28] sm:$0xff]
        %v347 = vld [vmem:[%s296 + $0x30] sm:$0xff]
        %v348 = vld [vmem:[%s296 + $0x38] sm:$0xff]
        %v349 = vld [vmem:[%s296 + $0x40] sm:$0xff]
        %v350 = vld [vmem:[%s296 + $0x48] sm:$0xff]
        %v351 = vld [vmem:[%s296 + $0x50] sm:$0xff]
        %v352 = vld [vmem:[%s296 + $0x58] sm:$0xff]
        %v353 = vld [vmem:[%s296 + $0x60] sm:$0xff]
        %v354 = vld [vmem:[%s296 + $0x68] sm:$0xff]
        %v355 = vld [vmem:[%s296 + $0x70] sm:$0xff]
        %v356 = vld [vmem:[%s296 + $0x78] sm:$0xff]
        %v357 = vld [vmem:[#allocation5] sm:$0xff]
        %v358 = vld [vmem:[#allocation5 + $0x8] sm:$0xff]
        %v359 = vld [vmem:[#allocation5 + $0x10] sm:$0xff]
        %v360 = vld [vmem:[#allocation5 + $0x18] sm:$0xff]
        %v361 = vld [vmem:[#allocation5 + $0x20] sm:$0xff]
        %v362 = vld [vmem:[#allocation5 + $0x28] sm:$0xff]
        %v363 = vld [vmem:[#allocation5 + $0x30] sm:$0xff]
        %v364 = vld [vmem:[#allocation5 + $0x38] sm:$0xff]
        %v365 = vld [vmem:[#allocation5 + $0x40] sm:$0xff]
        %v366 = vld [vmem:[#allocation5 + $0x48] sm:$0xff]
        %v367 = vld [vmem:[#allocation5 + $0x50] sm:$0xff]
        %v368 = vld [vmem:[#allocation5 + $0x58] sm:$0xff]
        %v369 = vld [vmem:[#allocation5 + $0x60] sm:$0xff]
        %v370 = vld [vmem:[#allocation5 + $0x68] sm:$0xff]
        %v371 = vld [vmem:[#allocation5 + $0x70] sm:$0xff]
        %v372 = vld [vmem:[#allocation5 + $0x78] sm:$0xff]
        %v373 = vld [vmem:[#allocation5 + $0x80] sm:$0xff]
        %v374 = vld [vmem:[#allocation5 + $0x88] sm:$0xff]
        %v375 = vld [vmem:[#allocation5 + $0x90] sm:$0xff]
        %v376 = vld [vmem:[#allocation5 + $0x98] sm:$0xff]
        %v377 = vld [vmem:[#allocation5 + $0xa0] sm:$0xff]
        %v378 = vld [vmem:[#allocation5 + $0xa8] sm:$0xff]
        %v379 = vld [vmem:[#allocation5 + $0xb0] sm:$0xff]
        %v380 = vld [vmem:[#allocation5 + $0xb8] sm:$0xff]
        %v381 = vld [vmem:[#allocation5 + $0xc0] sm:$0xff]
        %v382 = vld [vmem:[#allocation5 + $0xc8] sm:$0xff]
        %v383 = vld [vmem:[#allocation5 + $0xd0] sm:$0xff]
        %v384 = vld [vmem:[#allocation5 + $0xd8] sm:$0xff]
        %v385 = vld [vmem:[#allocation5 + $0xe0] sm:$0xff]
        %v386 = vld [vmem:[#allocation5 + $0xe8] sm:$0xff]
        %v387 = vld [vmem:[#allocation5 + $0xf0] sm:$0xff]
        %v388 = vld [vmem:[#allocation5 + $0xf8] sm:$0xff]
        %v389 = vld [vmem:[#allocation5 + $0x100] sm:$0xff]
        %v390 = vld [vmem:[#allocation5 + $0x108] sm:$0xff]
        %v391 = vld [vmem:[#allocation5 + $0x110] sm:$0xff]
        %v392 = vld [vmem:[#allocation5 + $0x118] sm:$0xff]
        %v393 = vld [vmem:[#allocation5 + $0x120] sm:$0xff]
        %v394 = vld [vmem:[#allocation5 + $0x128] sm:$0xff]
        %v395 = vld [vmem:[#allocation5 + $0x130] sm:$0xff]
        %v396 = vld [vmem:[#allocation5 + $0x138] sm:$0xff]
        %v397 = vld [vmem:[#allocation5 + $0x140] sm:$0xff]
        %v398 = vld [vmem:[#allocation5 + $0x148] sm:$0xff]
        %v399 = vld [vmem:[#allocation5 + $0x150] sm:$0xff]
        %v400 = vld [vmem:[#allocation5 + $0x158] sm:$0xff]
        %v401 = vld [vmem:[#allocation5 + $0x160] sm:$0xff]
        %v402 = vld [vmem:[#allocation5 + $0x168] sm:$0xff]
        %v403 = vld [vmem:[#allocation5 + $0x170] sm:$0xff]
        %v404 = vld [vmem:[#allocation5 + $0x178] sm:$0xff]
        %v405 = vld [vmem:[#allocation5 + $0x180] sm:$0xff]
        %v406 = vld [vmem:[#allocation5 + $0x188] sm:$0xff]
        %v407 = vld [vmem:[#allocation5 + $0x190] sm:$0xff]
        %v408 = vld [vmem:[#allocation5 + $0x198] sm:$0xff]
        %v409 = vld [vmem:[#allocation5 + $0x1a0] sm:$0xff]
        %v410 = vld [vmem:[#allocation5 + $0x1a8] sm:$0xff]
        %v411 = vld [vmem:[#allocation5 + $0x1b0] sm:$0xff]
        %v412 = vld [vmem:[#allocation5 + $0x1b8] sm:$0xff]
        %v413 = vld [vmem:[#allocation5 + $0x1c0] sm:$0xff]
        %v414 = vld [vmem:[#allocation5 + $0x1c8] sm:$0xff]
        %v415 = vld [vmem:[#allocation5 + $0x1d0] sm:$0xff]
        %v416 = vld [vmem:[#allocation5 + $0x1d8] sm:$0xff]
        %v417 = vld [vmem:[#allocation5 + $0x1e0] sm:$0xff]
        %v418 = vld [vmem:[#allocation5 + $0x1e8] sm:$0xff]
        %v419 = vld [vmem:[#allocation5 + $0x1f0] sm:$0xff]
        %v420 = vld [vmem:[#allocation5 + $0x1f8] sm:$0xff]
        %v421 = vld [vmem:[#allocation7] sm:$0xf]
        %v423 = vlaneseq
        %v424 = vshrl.u32 %v423, 7
        %v425 = vsub.s32 0, %v424
        %v426 = vrot.slane %v421, %v425
        %v427 = vlaneseq
        %v428 = vshrl.u32 %v427, 7
        %v429 = vsub.s32 1, %v428
        %v430 = vrot.slane %v421, %v429
        %v431 = vlaneseq
        %v432 = vshrl.u32 %v431, 7
        %v433 = vsub.s32 2, %v432
        %v434 = vrot.slane %v421, %v433
        %v435 = vlaneseq
        %v436 = vshrl.u32 %v435, 7
        %v437 = vsub.s32 3, %v436
        %v438 = vrot.slane %v421, %v437
        %443 = vmatprep.subr.mxu0 %v418
        %444 = vmatpush1.msra.mxu0 %v417
        %445 = vmatprep.subr.mxu0 %v414
        %446 = vmatpush1.msra.mxu0 %v413
        %447 = vmatprep.subr.mxu0 %v410
        %448 = vmatpush1.msra.mxu0 %v409
        %449 = vmatprep.subr.mxu0 %v406
        %450 = vmatpush1.msra.mxu0 %v405
        %451 = vmatprep.subr.mxu0 %v402
        %452 = vmatpush1.msra.mxu0 %v401
        %453 = vmatprep.subr.mxu0 %v398
        %454 = vmatpush1.msra.mxu0 %v397
        %455 = vmatprep.subr.mxu0 %v394
        %456 = vmatpush1.msra.mxu0 %v393
        %457 = vmatprep.subr.mxu0 %v390
        %458 = vmatpush1.msra.mxu0 %v389
        %459 = vmatprep.subr.mxu0 %v386
        %460 = vmatpush1.msra.mxu0 %v385
        %461 = vmatprep.subr.mxu0 %v382
        %462 = vmatpush1.msra.mxu0 %v381
        %463 = vmatprep.subr.mxu0 %v378
        %464 = vmatpush1.msra.mxu0 %v377
        %465 = vmatprep.subr.mxu0 %v374
        %466 = vmatpush1.msra.mxu0 %v373
        %467 = vmatprep.subr.mxu0 %v370
        %468 = vmatpush1.msra.mxu0 %v369
        %469 = vmatprep.subr.mxu0 %v366
        %470 = vmatpush1.msra.mxu0 %v365
        %471 = vmatprep.subr.mxu0 %v362
        %472 = vmatpush1.msra.mxu0 %v361
        %473 = vmatprep.subr.mxu0 %v358
        %474 = vmatpush1.msra.mxu0 %v357
        %475 = vmatprep.subr.mxu0 0.0
        %476 = vmatpush2.msra.mxu0 0.0
        %477 = vmatprep.subr.mxu0 0.0
        %478 = vmatpush2.msra.mxu0 0.0
        %479 = vmatprep.subr.mxu0 0.0
        %480 = vmatpush2.msra.mxu0 0.0
        %481 = vmatprep.subr.mxu0 0.0
        %482 = vmatpush2.msra.mxu0 0.0
        %483 = vmatprep.subr.mxu0 0.0
        %484 = vmatpush2.msra.mxu0 0.0
        %485 = vmatprep.subr.mxu0 0.0
        %486 = vmatpush2.msra.mxu0 0.0
        %487 = vmatprep.subr.mxu0 0.0
        %488 = vmatpush2.msra.mxu0 0.0
        %489 = vmatprep.subr.mxu0 0.0
        %490 = vmatpush2.msra.mxu0 0.0
        %491 = vmatprep.subr.mxu0 0.0
        %492 = vmatpush2.msra.mxu0 0.0
        %493 = vmatprep.subr.mxu0 0.0
        %494 = vmatpush2.msra.mxu0 0.0
        %495 = vmatprep.subr.mxu0 0.0
        %496 = vmatpush2.msra.mxu0 0.0
        %497 = vmatprep.subr.mxu0 0.0
        %498 = vmatpush2.msra.mxu0 0.0
        %499 = vmatprep.subr.mxu0 0.0
        %500 = vmatpush2.msra.mxu0 0.0
        %501 = vmatprep.subr.mxu0 0.0
        %502 = vmatpush2.msra.mxu0 0.0
        %503 = vmatprep.subr.mxu0 0.0
        %504 = vmatpush2.msra.mxu0 0.0
        %505 = vmatprep.subr.mxu0 0.0
        %506 = vmatpush2.msra.mxu0 0.0
        %507 = vmatprep.mubr.f32.mxu0 0.0
        %508 = vmatmul.mubr.f32.gmra.mxu0 %v341
        %v509 = vpop.f32.mrf.mxu0
        %v510 = vadd.f32 %v426, %v509
        %v511 = vpop.f32.mrf.mxu0
        %v512 = vadd.f32 %v430, %v511
        %513 = vmatprep.mubr.f32.mxu0 0.0
        %514 = vmatmul.mubr.f32.gmra.mxu0 %v342
        %v515 = vpop.f32.mrf.mxu0
        %v516 = vadd.f32 %v426, %v515
        %v517 = vpop.f32.mrf.mxu0
        %v518 = vadd.f32 %v430, %v517
        %519 = vmatprep.mubr.f32.mxu0 0.0
        %520 = vmatmul.mubr.f32.gmra.mxu0 %v343
        %v521 = vpop.f32.mrf.mxu0
        %v522 = vadd.f32 %v426, %v521
        %v523 = vpop.f32.mrf.mxu0
        %v524 = vadd.f32 %v430, %v523
        %525 = vmatprep.mubr.f32.mxu0 0.0
        %526 = vmatmul.mubr.f32.gmra.mxu0 %v344
        %v527 = vpop.f32.mrf.mxu0
        %v528 = vadd.f32 %v426, %v527
        %v529 = vpop.f32.mrf.mxu0
        %v530 = vadd.f32 %v430, %v529
        %531 = vmatprep.mubr.f32.mxu0 0.0
        %532 = vmatmul.mubr.f32.gmra.mxu0 %v345
        %v533 = vpop.f32.mrf.mxu0
        %v534 = vadd.f32 %v426, %v533
        %v535 = vpop.f32.mrf.mxu0
        %v536 = vadd.f32 %v430, %v535
        %537 = vmatprep.mubr.f32.mxu0 0.0
        %538 = vmatmul.mubr.f32.gmra.mxu0 %v346
        %v539 = vpop.f32.mrf.mxu0
        %v540 = vadd.f32 %v426, %v539
        %v541 = vpop.f32.mrf.mxu0
        %v542 = vadd.f32 %v430, %v541
        %543 = vmatprep.mubr.f32.mxu0 0.0
        %544 = vmatmul.mubr.f32.gmra.mxu0 %v347
        %v545 = vpop.f32.mrf.mxu0
        %v546 = vadd.f32 %v426, %v545
        %v547 = vpop.f32.mrf.mxu0
        %v548 = vadd.f32 %v430, %v547
        %549 = vmatprep.mubr.f32.mxu0 0.0
        %550 = vmatmul.mubr.f32.gmra.mxu0 %v348
        %v551 = vpop.f32.mrf.mxu0
        %v552 = vadd.f32 %v426, %v551
        %v553 = vpop.f32.mrf.mxu0
        %v554 = vadd.f32 %v430, %v553
        %555 = vmatprep.mubr.f32.mxu0 0.0
        %556 = vmatmul.mubr.f32.gmra.mxu0 %v349
        %v557 = vpop.f32.mrf.mxu0
        %v558 = vadd.f32 %v426, %v557
        %v559 = vpop.f32.mrf.mxu0
        %v560 = vadd.f32 %v430, %v559
        %561 = vmatprep.mubr.f32.mxu0 0.0
        %562 = vmatmul.mubr.f32.gmra.mxu0 %v350
        %v563 = vpop.f32.mrf.mxu0
        %v564 = vadd.f32 %v426, %v563
        %v565 = vpop.f32.mrf.mxu0
        %v566 = vadd.f32 %v430, %v565
        %567 = vmatprep.mubr.f32.mxu0 0.0
        %568 = vmatmul.mubr.f32.gmra.mxu0 %v351
        %v569 = vpop.f32.mrf.mxu0
        %v570 = vadd.f32 %v426, %v569
        %v571 = vpop.f32.mrf.mxu0
        %v572 = vadd.f32 %v430, %v571
        %573 = vmatprep.mubr.f32.mxu0 0.0
        %574 = vmatmul.mubr.f32.gmra.mxu0 %v352
        %v575 = vpop.f32.mrf.mxu0
        %v576 = vadd.f32 %v426, %v575
        %v577 = vpop.f32.mrf.mxu0
        %v578 = vadd.f32 %v430, %v577
        %579 = vmatprep.mubr.f32.mxu0 0.0
        %580 = vmatmul.mubr.f32.gmra.mxu0 %v353
        %v581 = vpop.f32.mrf.mxu0
        %v582 = vadd.f32 %v426, %v581
        %v583 = vpop.f32.mrf.mxu0
        %v584 = vadd.f32 %v430, %v583
        %585 = vmatprep.mubr.f32.mxu0 0.0
        %586 = vmatmul.mubr.f32.gmra.mxu0 %v354
        %v587 = vpop.f32.mrf.mxu0
        %v588 = vadd.f32 %v426, %v587
        %v589 = vpop.f32.mrf.mxu0
        %v590 = vadd.f32 %v430, %v589
        %591 = vmatprep.mubr.f32.mxu0 0.0
        %592 = vmatmul.mubr.f32.gmra.mxu0 %v355
        %v593 = vpop.f32.mrf.mxu0
        %v594 = vadd.f32 %v426, %v593
        %v595 = vpop.f32.mrf.mxu0
        %v596 = vadd.f32 %v430, %v595
        %597 = vmatprep.mubr.f32.mxu0 0.0
        %598 = vmatmul.mubr.f32.gmra.mxu0 %v356
        %v599 = vpop.f32.mrf.mxu0
        %v600 = vadd.f32 %v426, %v599
        %v601 = vpop.f32.mrf.mxu0
        %v602 = vadd.f32 %v430, %v601
        %603 = vdwg.mxu0
        %604 = vmatprep.subr.mxu0 %v420
        %605 = vmatpush1.msra.mxu0 %v419
        %606 = vmatprep.subr.mxu0 %v416
        %607 = vmatpush1.msra.mxu0 %v415
        %608 = vmatprep.subr.mxu0 %v412
        %609 = vmatpush1.msra.mxu0 %v411
        %610 = vmatprep.subr.mxu0 %v408
        %611 = vmatpush1.msra.mxu0 %v407
        %612 = vmatprep.subr.mxu0 %v404
        %613 = vmatpush1.msra.mxu0 %v403
        %614 = vmatprep.subr.mxu0 %v400
        %615 = vmatpush1.msra.mxu0 %v399
        %616 = vmatprep.subr.mxu0 %v396
        %617 = vmatpush1.msra.mxu0 %v395
        %618 = vmatprep.subr.mxu0 %v392
        %619 = vmatpush1.msra.mxu0 %v391
        %620 = vmatprep.subr.mxu0 %v388
        %621 = vmatpush1.msra.mxu0 %v387
        %622 = vmatprep.subr.mxu0 %v384
        %623 = vmatpush1.msra.mxu0 %v383
        %624 = vmatprep.subr.mxu0 %v380
        %625 = vmatpush1.msra.mxu0 %v379
        %626 = vmatprep.subr.mxu0 %v376
        %627 = vmatpush1.msra.mxu0 %v375
        %628 = vmatprep.subr.mxu0 %v372
        %629 = vmatpush1.msra.mxu0 %v371
        %630 = vmatprep.subr.mxu0 %v368
        %631 = vmatpush1.msra.mxu0 %v367
        %632 = vmatprep.subr.mxu0 %v364
        %633 = vmatpush1.msra.mxu0 %v363
        %634 = vmatprep.subr.mxu0 %v360
        %635 = vmatpush1.msra.mxu0 %v359
        %636 = vmatprep.subr.mxu0 0.0
        %637 = vmatpush2.msra.mxu0 0.0
        %638 = vmatprep.subr.mxu0 0.0
        %639 = vmatpush2.msra.mxu0 0.0
        %640 = vmatprep.subr.mxu0 0.0
        %641 = vmatpush2.msra.mxu0 0.0
        %642 = vmatprep.subr.mxu0 0.0
        %643 = vmatpush2.msra.mxu0 0.0
        %644 = vmatprep.subr.mxu0 0.0
        %645 = vmatpush2.msra.mxu0 0.0
        %646 = vmatprep.subr.mxu0 0.0
        %647 = vmatpush2.msra.mxu0 0.0
        %648 = vmatprep.subr.mxu0 0.0
        %649 = vmatpush2.msra.mxu0 0.0
        %650 = vmatprep.subr.mxu0 0.0
        %651 = vmatpush2.msra.mxu0 0.0
        %652 = vmatprep.subr.mxu0 0.0
        %653 = vmatpush2.msra.mxu0 0.0
        %654 = vmatprep.subr.mxu0 0.0
        %655 = vmatpush2.msra.mxu0 0.0
        %656 = vmatprep.subr.mxu0 0.0
        %657 = vmatpush2.msra.mxu0 0.0
        %658 = vmatprep.subr.mxu0 0.0
        %659 = vmatpush2.msra.mxu0 0.0
        %660 = vmatprep.subr.mxu0 0.0
        %661 = vmatpush2.msra.mxu0 0.0
        %662 = vmatprep.subr.mxu0 0.0
        %663 = vmatpush2.msra.mxu0 0.0
        %664 = vmatprep.subr.mxu0 0.0
        %665 = vmatpush2.msra.mxu0 0.0
        %666 = vmatprep.subr.mxu0 0.0
        %667 = vmatpush2.msra.mxu0 0.0
        %668 = vmatprep.mubr.f32.mxu0 0.0
        %669 = vmatmul.mubr.f32.gmra.mxu0 %v341
        %v670 = vpop.f32.mrf.mxu0
        %v671 = vadd.f32 %v434, %v670
        %v672 = vpop.f32.mrf.mxu0
        %v673 = vadd.f32 %v438, %v672
        %674 = vmatprep.mubr.f32.mxu0 0.0
        %675 = vmatmul.mubr.f32.gmra.mxu0 %v342
        %v676 = vpop.f32.mrf.mxu0
        %v677 = vadd.f32 %v434, %v676
        %v678 = vpop.f32.mrf.mxu0
        %v679 = vadd.f32 %v438, %v678
        %680 = vmatprep.mubr.f32.mxu0 0.0
        %681 = vmatmul.mubr.f32.gmra.mxu0 %v343
        %v682 = vpop.f32.mrf.mxu0
        %v683 = vadd.f32 %v434, %v682
        %v684 = vpop.f32.mrf.mxu0
        %v685 = vadd.f32 %v438, %v684
        %686 = vmatprep.mubr.f32.mxu0 0.0
        %687 = vmatmul.mubr.f32.gmra.mxu0 %v344
        %v688 = vpop.f32.mrf.mxu0
        %v689 = vadd.f32 %v434, %v688
        %v690 = vpop.f32.mrf.mxu0
        %v691 = vadd.f32 %v438, %v690
        %692 = vmatprep.mubr.f32.mxu0 0.0
        %693 = vmatmul.mubr.f32.gmra.mxu0 %v345
        %v694 = vpop.f32.mrf.mxu0
        %v695 = vadd.f32 %v434, %v694
        %v696 = vpop.f32.mrf.mxu0
        %v697 = vadd.f32 %v438, %v696
        %698 = vmatprep.mubr.f32.mxu0 0.0
        %699 = vmatmul.mubr.f32.gmra.mxu0 %v346
        %v700 = vpop.f32.mrf.mxu0
        %v701 = vadd.f32 %v434, %v700
        %v702 = vpop.f32.mrf.mxu0
        %v703 = vadd.f32 %v438, %v702
        %704 = vmatprep.mubr.f32.mxu0 0.0
        %705 = vmatmul.mubr.f32.gmra.mxu0 %v347
        %v706 = vpop.f32.mrf.mxu0
        %v707 = vadd.f32 %v434, %v706
        %v708 = vpop.f32.mrf.mxu0
        %v709 = vadd.f32 %v438, %v708
        %710 = vmatprep.mubr.f32.mxu0 0.0
        %711 = vmatmul.mubr.f32.gmra.mxu0 %v348
        %v712 = vpop.f32.mrf.mxu0
        %v713 = vadd.f32 %v434, %v712
        %v714 = vpop.f32.mrf.mxu0
        %v715 = vadd.f32 %v438, %v714
        %716 = vmatprep.mubr.f32.mxu0 0.0
        %717 = vmatmul.mubr.f32.gmra.mxu0 %v349
        %v718 = vpop.f32.mrf.mxu0
        %v719 = vadd.f32 %v434, %v718
        %v720 = vpop.f32.mrf.mxu0
        %v721 = vadd.f32 %v438, %v720
        %722 = vmatprep.mubr.f32.mxu0 0.0
        %723 = vmatmul.mubr.f32.gmra.mxu0 %v350
        %v724 = vpop.f32.mrf.mxu0
        %v725 = vadd.f32 %v434, %v724
        %v726 = vpop.f32.mrf.mxu0
        %v727 = vadd.f32 %v438, %v726
        %728 = vmatprep.mubr.f32.mxu0 0.0
        %729 = vmatmul.mubr.f32.gmra.mxu0 %v351
        %v730 = vpop.f32.mrf.mxu0
        %v731 = vadd.f32 %v434, %v730
        %v732 = vpop.f32.mrf.mxu0
        %v733 = vadd.f32 %v438, %v732
        %734 = vmatprep.mubr.f32.mxu0 0.0
        %735 = vmatmul.mubr.f32.gmra.mxu0 %v352
        %v736 = vpop.f32.mrf.mxu0
        %v737 = vadd.f32 %v434, %v736
        %v738 = vpop.f32.mrf.mxu0
        %v739 = vadd.f32 %v438, %v738
        %740 = vmatprep.mubr.f32.mxu0 0.0
        %741 = vmatmul.mubr.f32.gmra.mxu0 %v353
        %v742 = vpop.f32.mrf.mxu0
        %v743 = vadd.f32 %v434, %v742
        %v744 = vpop.f32.mrf.mxu0
        %v745 = vadd.f32 %v438, %v744
        %746 = vmatprep.mubr.f32.mxu0 0.0
        %747 = vmatmul.mubr.f32.gmra.mxu0 %v354
        %v748 = vpop.f32.mrf.mxu0
        %v749 = vadd.f32 %v434, %v748
        %v750 = vpop.f32.mrf.mxu0
        %v751 = vadd.f32 %v438, %v750
        %752 = vmatprep.mubr.f32.mxu0 0.0
        %753 = vmatmul.mubr.f32.gmra.mxu0 %v355
        %v754 = vpop.f32.mrf.mxu0
        %v755 = vadd.f32 %v434, %v754
        %v756 = vpop.f32.mrf.mxu0
        %v757 = vadd.f32 %v438, %v756
        %758 = vmatprep.mubr.f32.mxu0 0.0
        %759 = vmatmul.mubr.f32.gmra.mxu0 %v356
        %v760 = vpop.f32.mrf.mxu0
        %v761 = vadd.f32 %v434, %v760
        %v762 = vpop.f32.mrf.mxu0
        %v763 = vadd.f32 %v438, %v762
        %764 = vdwg.mxu0
        %v765 = vmax.f32 %v510, 0.0
        %v766 = vmax.f32 %v512, 0.0
        %v767 = vmax.f32 %v671, 0.0
        %v768 = vmax.f32 %v673, 0.0
        %v769 = vmax.f32 %v516, 0.0
        %v770 = vmax.f32 %v518, 0.0
        %v771 = vmax.f32 %v677, 0.0
        %v772 = vmax.f32 %v679, 0.0
        %v773 = vmax.f32 %v522, 0.0
        %v774 = vmax.f32 %v524, 0.0
        %v775 = vmax.f32 %v683, 0.0
        %v776 = vmax.f32 %v685, 0.0
        %v777 = vmax.f32 %v528, 0.0
        %v778 = vmax.f32 %v530, 0.0
        %v779 = vmax.f32 %v689, 0.0
        %v780 = vmax.f32 %v691, 0.0
        %v781 = vmax.f32 %v534, 0.0
        %v782 = vmax.f32 %v536, 0.0
        %v783 = vmax.f32 %v695, 0.0
        %v784 = vmax.f32 %v697, 0.0
        %v785 = vmax.f32 %v540, 0.0
        %v786 = vmax.f32 %v542, 0.0
        %v787 = vmax.f32 %v701, 0.0
        %v788 = vmax.f32 %v703, 0.0
        %v789 = vmax.f32 %v546, 0.0
        %v790 = vmax.f32 %v548, 0.0
        %v791 = vmax.f32 %v707, 0.0
        %v792 = vmax.f32 %v709, 0.0
        %v793 = vmax.f32 %v552, 0.0
        %v794 = vmax.f32 %v554, 0.0
        %v795 = vmax.f32 %v713, 0.0
        %v796 = vmax.f32 %v715, 0.0
        %v797 = vmax.f32 %v558, 0.0
        %v798 = vmax.f32 %v560, 0.0
        %v799 = vmax.f32 %v719, 0.0
        %v800 = vmax.f32 %v721, 0.0
        %v801 = vmax.f32 %v564, 0.0
        %v802 = vmax.f32 %v566, 0.0
        %v803 = vmax.f32 %v725, 0.0
        %v804 = vmax.f32 %v727, 0.0
        %v805 = vmax.f32 %v570, 0.0
        %v806 = vmax.f32 %v572, 0.0
        %v807 = vmax.f32 %v731, 0.0
        %v808 = vmax.f32 %v733, 0.0
        %v809 = vmax.f32 %v576, 0.0
        %v810 = vmax.f32 %v578, 0.0
        %v811 = vmax.f32 %v737, 0.0
        %v812 = vmax.f32 %v739, 0.0
        %v813 = vmax.f32 %v582, 0.0
        %v814 = vmax.f32 %v584, 0.0
        %v815 = vmax.f32 %v743, 0.0
        %v816 = vmax.f32 %v745, 0.0
        %v817 = vmax.f32 %v588, 0.0
        %v818 = vmax.f32 %v590, 0.0
        %v819 = vmax.f32 %v749, 0.0
        %v820 = vmax.f32 %v751, 0.0
        %v821 = vmax.f32 %v594, 0.0
        %v822 = vmax.f32 %v596, 0.0
        %v823 = vmax.f32 %v755, 0.0
        %v824 = vmax.f32 %v757, 0.0
        %v825 = vmax.f32 %v600, 0.0
        %v826 = vmax.f32 %v602, 0.0
        %v827 = vmax.f32 %v761, 0.0
        %v828 = vmax.f32 %v763, 0.0
        %v829 = vld [vmem:[#allocation8] sm:$0xff]
        %v830 = vld [vmem:[#allocation8 + $0x8] sm:$0xff]
        %v831 = vld [vmem:[#allocation8 + $0x10] sm:$0xff]
        %v832 = vld [vmem:[#allocation8 + $0x18] sm:$0xff]
        %v833 = vld [vmem:[#allocation8 + $0x20] sm:$0xff]
        %v834 = vld [vmem:[#allocation8 + $0x28] sm:$0xff]
        %v835 = vld [vmem:[#allocation8 + $0x30] sm:$0xff]
        %v836 = vld [vmem:[#allocation8 + $0x38] sm:$0xff]
        %v837 = vld [vmem:[#allocation8 + $0x40] sm:$0xff]
        %v838 = vld [vmem:[#allocation8 + $0x48] sm:$0xff]
        %v839 = vld [vmem:[#allocation8 + $0x50] sm:$0xff]
        %v840 = vld [vmem:[#allocation8 + $0x58] sm:$0xff]
        %v841 = vld [vmem:[#allocation8 + $0x60] sm:$0xff]
        %v842 = vld [vmem:[#allocation8 + $0x68] sm:$0xff]
        %v843 = vld [vmem:[#allocation8 + $0x70] sm:$0xff]
        %v844 = vld [vmem:[#allocation8 + $0x78] sm:$0xff]
        %v845 = vld [vmem:[#allocation8 + $0x80] sm:$0xff]
        %v846 = vld [vmem:[#allocation8 + $0x88] sm:$0xff]
        %v847 = vld [vmem:[#allocation8 + $0x90] sm:$0xff]
        %v848 = vld [vmem:[#allocation8 + $0x98] sm:$0xff]
        %v849 = vld [vmem:[#allocation8 + $0xa0] sm:$0xff]
        %v850 = vld [vmem:[#allocation8 + $0xa8] sm:$0xff]
        %v851 = vld [vmem:[#allocation8 + $0xb0] sm:$0xff]
        %v852 = vld [vmem:[#allocation8 + $0xb8] sm:$0xff]
        %v853 = vld [vmem:[#allocation8 + $0xc0] sm:$0xff]
        %v854 = vld [vmem:[#allocation8 + $0xc8] sm:$0xff]
        %v855 = vld [vmem:[#allocation8 + $0xd0] sm:$0xff]
        %v856 = vld [vmem:[#allocation8 + $0xd8] sm:$0xff]
        %v857 = vld [vmem:[#allocation8 + $0xe0] sm:$0xff]
        %v858 = vld [vmem:[#allocation8 + $0xe8] sm:$0xff]
        %v859 = vld [vmem:[#allocation8 + $0xf0] sm:$0xff]
        %v860 = vld [vmem:[#allocation8 + $0xf8] sm:$0xff]
        %v861 = vld [vmem:[#allocation8 + $0x100] sm:$0xff]
        %v862 = vld [vmem:[#allocation8 + $0x108] sm:$0xff]
        %v863 = vld [vmem:[#allocation8 + $0x110] sm:$0xff]
        %v864 = vld [vmem:[#allocation8 + $0x118] sm:$0xff]
        %v865 = vld [vmem:[#allocation8 + $0x120] sm:$0xff]
        %v866 = vld [vmem:[#allocation8 + $0x128] sm:$0xff]
        %v867 = vld [vmem:[#allocation8 + $0x130] sm:$0xff]
        %v868 = vld [vmem:[#allocation8 + $0x138] sm:$0xff]
        %v869 = vld [vmem:[#allocation8 + $0x140] sm:$0xff]
        %v870 = vld [vmem:[#allocation8 + $0x148] sm:$0xff]
        %v871 = vld [vmem:[#allocation8 + $0x150] sm:$0xff]
        %v872 = vld [vmem:[#allocation8 + $0x158] sm:$0xff]
        %v873 = vld [vmem:[#allocation8 + $0x160] sm:$0xff]
        %v874 = vld [vmem:[#allocation8 + $0x168] sm:$0xff]
        %v875 = vld [vmem:[#allocation8 + $0x170] sm:$0xff]
        %v876 = vld [vmem:[#allocation8 + $0x178] sm:$0xff]
        %v877 = vld [vmem:[#allocation8 + $0x180] sm:$0xff]
        %v878 = vld [vmem:[#allocation8 + $0x188] sm:$0xff]
        %v879 = vld [vmem:[#allocation8 + $0x190] sm:$0xff]
        %v880 = vld [vmem:[#allocation8 + $0x198] sm:$0xff]
        %v881 = vld [vmem:[#allocation8 + $0x1a0] sm:$0xff]
        %v882 = vld [vmem:[#allocation8 + $0x1a8] sm:$0xff]
        %v883 = vld [vmem:[#allocation8 + $0x1b0] sm:$0xff]
        %v884 = vld [vmem:[#allocation8 + $0x1b8] sm:$0xff]
        %v885 = vld [vmem:[#allocation8 + $0x1c0] sm:$0xff]
        %v886 = vld [vmem:[#allocation8 + $0x1c8] sm:$0xff]
        %v887 = vld [vmem:[#allocation8 + $0x1d0] sm:$0xff]
        %v888 = vld [vmem:[#allocation8 + $0x1d8] sm:$0xff]
        %v889 = vld [vmem:[#allocation8 + $0x1e0] sm:$0xff]
        %v890 = vld [vmem:[#allocation8 + $0x1e8] sm:$0xff]
        %v891 = vld [vmem:[#allocation8 + $0x1f0] sm:$0xff]
        %v892 = vld [vmem:[#allocation8 + $0x1f8] sm:$0xff]
        %v893 = vld [vmem:[%s4] sm:$0x1]
        %v895 = vlaneseq
        %v896 = vshrl.u32 %v895, 7
        %v897 = vsub.s32 0, %v896
        %v898 = vrot.slane %v893, %v897
        %900 = vmatprep.subr.mxu0 0.0
        %901 = vmatpush1.msra.mxu0 %v844
        %902 = vmatprep.subr.mxu0 0.0
        %903 = vmatpush1.msra.mxu0 %v843
        %904 = vmatprep.subr.mxu0 0.0
        %905 = vmatpush1.msra.mxu0 %v842
        %906 = vmatprep.subr.mxu0 0.0
        %907 = vmatpush1.msra.mxu0 %v841
        %908 = vmatprep.subr.mxu0 0.0
        %909 = vmatpush1.msra.mxu0 %v840
        %910 = vmatprep.subr.mxu0 0.0
        %911 = vmatpush1.msra.mxu0 %v839
        %912 = vmatprep.subr.mxu0 0.0
        %913 = vmatpush1.msra.mxu0 %v838
        %914 = vmatprep.subr.mxu0 0.0
        %915 = vmatpush1.msra.mxu0 %v837
        %916 = vmatprep.subr.mxu0 0.0
        %917 = vmatpush1.msra.mxu0 %v836
        %918 = vmatprep.subr.mxu0 0.0
        %919 = vmatpush1.msra.mxu0 %v835
        %920 = vmatprep.subr.mxu0 0.0
        %921 = vmatpush1.msra.mxu0 %v834
        %922 = vmatprep.subr.mxu0 0.0
        %923 = vmatpush1.msra.mxu0 %v833
        %924 = vmatprep.subr.mxu0 0.0
        %925 = vmatpush1.msra.mxu0 %v832
        %926 = vmatprep.subr.mxu0 0.0
        %927 = vmatpush1.msra.mxu0 %v831
        %928 = vmatprep.subr.mxu0 0.0
        %929 = vmatpush1.msra.mxu0 %v830
        %930 = vmatprep.subr.mxu0 0.0
        %931 = vmatpush1.msra.mxu0 %v829
        %932 = vmatprep.subr.mxu0 0.0
        %933 = vmatpush2.msra.mxu0 %v860
        %934 = vmatprep.subr.mxu0 0.0
        %935 = vmatpush2.msra.mxu0 %v859
        %936 = vmatprep.subr.mxu0 0.0
        %937 = vmatpush2.msra.mxu0 %v858
        %938 = vmatprep.subr.mxu0 0.0
        %939 = vmatpush2.msra.mxu0 %v857
        %940 = vmatprep.subr.mxu0 0.0
        %941 = vmatpush2.msra.mxu0 %v856
        %942 = vmatprep.subr.mxu0 0.0
        %943 = vmatpush2.msra.mxu0 %v855
        %944 = vmatprep.subr.mxu0 0.0
        %945 = vmatpush2.msra.mxu0 %v854
        %946 = vmatprep.subr.mxu0 0.0
        %947 = vmatpush2.msra.mxu0 %v853
        %948 = vmatprep.subr.mxu0 0.0
        %949 = vmatpush2.msra.mxu0 %v852
        %950 = vmatprep.subr.mxu0 0.0
        %951 = vmatpush2.msra.mxu0 %v851
        %952 = vmatprep.subr.mxu0 0.0
        %953 = vmatpush2.msra.mxu0 %v850
        %954 = vmatprep.subr.mxu0 0.0
        %955 = vmatpush2.msra.mxu0 %v849
        %956 = vmatprep.subr.mxu0 0.0
        %957 = vmatpush2.msra.mxu0 %v848
        %958 = vmatprep.subr.mxu0 0.0
        %959 = vmatpush2.msra.mxu0 %v847
        %960 = vmatprep.subr.mxu0 0.0
        %961 = vmatpush2.msra.mxu0 %v846
        %962 = vmatprep.subr.mxu0 0.0
        %963 = vmatpush2.msra.mxu0 %v845
        %964 = vmatprep.mubr.f32.mxu0 %v766
        %965 = vmatmul.mubr.f32.gmra.mxu0 %v765
        %v966 = vpop.f32.mrf.mxu0
        %v967 = vadd.f32 %v898, %v966
        %v968 = vpop.f32.mrf.mxu0
        %969 = vmatprep.mubr.f32.mxu0 %v770
        %970 = vmatmul.mubr.f32.gmra.mxu0 %v769
        %v971 = vpop.f32.mrf.mxu0
        %v972 = vadd.f32 %v898, %v971
        %v973 = vpop.f32.mrf.mxu0
        %974 = vmatprep.mubr.f32.mxu0 %v774
        %975 = vmatmul.mubr.f32.gmra.mxu0 %v773
        %v976 = vpop.f32.mrf.mxu0
        %v977 = vadd.f32 %v898, %v976
        %v978 = vpop.f32.mrf.mxu0
        %979 = vmatprep.mubr.f32.mxu0 %v778
        %980 = vmatmul.mubr.f32.gmra.mxu0 %v777
        %v981 = vpop.f32.mrf.mxu0
        %v982 = vadd.f32 %v898, %v981
        %v983 = vpop.f32.mrf.mxu0
        %984 = vmatprep.mubr.f32.mxu0 %v782
        %985 = vmatmul.mubr.f32.gmra.mxu0 %v781
        %v986 = vpop.f32.mrf.mxu0
        %v987 = vadd.f32 %v898, %v986
        %v988 = vpop.f32.mrf.mxu0
        %989 = vmatprep.mubr.f32.mxu0 %v786
        %990 = vmatmul.mubr.f32.gmra.mxu0 %v785
        %v991 = vpop.f32.mrf.mxu0
        %v992 = vadd.f32 %v898, %v991
        %v993 = vpop.f32.mrf.mxu0
        %994 = vmatprep.mubr.f32.mxu0 %v790
        %995 = vmatmul.mubr.f32.gmra.mxu0 %v789
        %v996 = vpop.f32.mrf.mxu0
        %v997 = vadd.f32 %v898, %v996
        %v998 = vpop.f32.mrf.mxu0
        %999 = vmatprep.mubr.f32.mxu0 %v794
        %1000 = vmatmul.mubr.f32.gmra.mxu0 %v793
        %v1001 = vpop.f32.mrf.mxu0
        %v1002 = vadd.f32 %v898, %v1001
        %v1003 = vpop.f32.mrf.mxu0
        %1004 = vmatprep.mubr.f32.mxu0 %v798
        %1005 = vmatmul.mubr.f32.gmra.mxu0 %v797
        %v1006 = vpop.f32.mrf.mxu0
        %v1007 = vadd.f32 %v898, %v1006
        %v1008 = vpop.f32.mrf.mxu0
        %1009 = vmatprep.mubr.f32.mxu0 %v802
        %1010 = vmatmul.mubr.f32.gmra.mxu0 %v801
        %v1011 = vpop.f32.mrf.mxu0
        %v1012 = vadd.f32 %v898, %v1011
        %v1013 = vpop.f32.mrf.mxu0
        %1014 = vmatprep.mubr.f32.mxu0 %v806
        %1015 = vmatmul.mubr.f32.gmra.mxu0 %v805
        %v1016 = vpop.f32.mrf.mxu0
        %v1017 = vadd.f32 %v898, %v1016
        %v1018 = vpop.f32.mrf.mxu0
        %1019 = vmatprep.mubr.f32.mxu0 %v810
        %1020 = vmatmul.mubr.f32.gmra.mxu0 %v809
        %v1021 = vpop.f32.mrf.mxu0
        %v1022 = vadd.f32 %v898, %v1021
        %v1023 = vpop.f32.mrf.mxu0
        %1024 = vmatprep.mubr.f32.mxu0 %v814
        %1025 = vmatmul.mubr.f32.gmra.mxu0 %v813
        %v1026 = vpop.f32.mrf.mxu0
        %v1027 = vadd.f32 %v898, %v1026
        %v1028 = vpop.f32.mrf.mxu0
        %1029 = vmatprep.mubr.f32.mxu0 %v818
        %1030 = vmatmul.mubr.f32.gmra.mxu0 %v817
        %v1031 = vpop.f32.mrf.mxu0
        %v1032 = vadd.f32 %v898, %v1031
        %v1033 = vpop.f32.mrf.mxu0
        %1034 = vmatprep.mubr.f32.mxu0 %v822
        %1035 = vmatmul.mubr.f32.gmra.mxu0 %v821
        %v1036 = vpop.f32.mrf.mxu0
        %v1037 = vadd.f32 %v898, %v1036
        %v1038 = vpop.f32.mrf.mxu0
        %1039 = vmatprep.mubr.f32.mxu0 %v826
        %1040 = vmatmul.mubr.f32.gmra.mxu0 %v825
        %v1041 = vpop.f32.mrf.mxu0
        %v1042 = vadd.f32 %v898, %v1041
        %v1043 = vpop.f32.mrf.mxu0
        %1044 = vdwg.mxu0
        %1045 = vmatprep.subr.mxu0 0.0
        %1046 = vmatpush1.msra.mxu0 %v876
        %1047 = vmatprep.subr.mxu0 0.0
        %1048 = vmatpush1.msra.mxu0 %v875
        %1049 = vmatprep.subr.mxu0 0.0
        %1050 = vmatpush1.msra.mxu0 %v874
        %1051 = vmatprep.subr.mxu0 0.0
        %1052 = vmatpush1.msra.mxu0 %v873
        %1053 = vmatprep.subr.mxu0 0.0
        %1054 = vmatpush1.msra.mxu0 %v872
        %1055 = vmatprep.subr.mxu0 0.0
        %1056 = vmatpush1.msra.mxu0 %v871
        %1057 = vmatprep.subr.mxu0 0.0
        %1058 = vmatpush1.msra.mxu0 %v870
        %1059 = vmatprep.subr.mxu0 0.0
        %1060 = vmatpush1.msra.mxu0 %v869
        %1061 = vmatprep.subr.mxu0 0.0
        %1062 = vmatpush1.msra.mxu0 %v868
        %1063 = vmatprep.subr.mxu0 0.0
        %1064 = vmatpush1.msra.mxu0 %v867
        %1065 = vmatprep.subr.mxu0 0.0
        %1066 = vmatpush1.msra.mxu0 %v866
        %1067 = vmatprep.subr.mxu0 0.0
        %1068 = vmatpush1.msra.mxu0 %v865
        %1069 = vmatprep.subr.mxu0 0.0
        %1070 = vmatpush1.msra.mxu0 %v864
        %1071 = vmatprep.subr.mxu0 0.0
        %1072 = vmatpush1.msra.mxu0 %v863
        %1073 = vmatprep.subr.mxu0 0.0
        %1074 = vmatpush1.msra.mxu0 %v862
        %1075 = vmatprep.subr.mxu0 0.0
        %1076 = vmatpush1.msra.mxu0 %v861
        %1077 = vmatprep.subr.mxu0 0.0
        %1078 = vmatpush2.msra.mxu0 %v892
        %1079 = vmatprep.subr.mxu0 0.0
        %1080 = vmatpush2.msra.mxu0 %v891
        %1081 = vmatprep.subr.mxu0 0.0
        %1082 = vmatpush2.msra.mxu0 %v890
        %1083 = vmatprep.subr.mxu0 0.0
        %1084 = vmatpush2.msra.mxu0 %v889
        %1085 = vmatprep.subr.mxu0 0.0
        %1086 = vmatpush2.msra.mxu0 %v888
        %1087 = vmatprep.subr.mxu0 0.0
        %1088 = vmatpush2.msra.mxu0 %v887
        %1089 = vmatprep.subr.mxu0 0.0
        %1090 = vmatpush2.msra.mxu0 %v886
        %1091 = vmatprep.subr.mxu0 0.0
        %1092 = vmatpush2.msra.mxu0 %v885
        %1093 = vmatprep.subr.mxu0 0.0
        %1094 = vmatpush2.msra.mxu0 %v884
        %1095 = vmatprep.subr.mxu0 0.0
        %1096 = vmatpush2.msra.mxu0 %v883
        %1097 = vmatprep.subr.mxu0 0.0
        %1098 = vmatpush2.msra.mxu0 %v882
        %1099 = vmatprep.subr.mxu0 0.0
        %1100 = vmatpush2.msra.mxu0 %v881
        %1101 = vmatprep.subr.mxu0 0.0
        %1102 = vmatpush2.msra.mxu0 %v880
        %1103 = vmatprep.subr.mxu0 0.0
        %1104 = vmatpush2.msra.mxu0 %v879
        %1105 = vmatprep.subr.mxu0 0.0
        %1106 = vmatpush2.msra.mxu0 %v878
        %1107 = vmatprep.subr.mxu0 0.0
        %1108 = vmatpush2.msra.mxu0 %v877
        %1109 = vmatprep.mubr.f32.mxu0 %v768
        %1110 = vmatmul.mubr.f32.gmra.mxu0 %v767
        %v1111 = vpop.f32.mrf.mxu0
        %v1112 = vadd.f32 %v967, %v1111
        %v1113 = vpop.f32.mrf.mxu0
        %1114 = vmatprep.mubr.f32.mxu0 %v772
        %1115 = vmatmul.mubr.f32.gmra.mxu0 %v771
        %v1116 = vpop.f32.mrf.mxu0
        %v1117 = vadd.f32 %v972, %v1116
        %v1118 = vpop.f32.mrf.mxu0
        %1119 = vmatprep.mubr.f32.mxu0 %v776
        %1120 = vmatmul.mubr.f32.gmra.mxu0 %v775
        %v1121 = vpop.f32.mrf.mxu0
        %v1122 = vadd.f32 %v977, %v1121
        %v1123 = vpop.f32.mrf.mxu0
        %1124 = vmatprep.mubr.f32.mxu0 %v780
        %1125 = vmatmul.mubr.f32.gmra.mxu0 %v779
        %v1126 = vpop.f32.mrf.mxu0
        %v1127 = vadd.f32 %v982, %v1126
        %v1128 = vpop.f32.mrf.mxu0
        %1129 = vmatprep.mubr.f32.mxu0 %v784
        %1130 = vmatmul.mubr.f32.gmra.mxu0 %v783
        %v1131 = vpop.f32.mrf.mxu0
        %v1132 = vadd.f32 %v987, %v1131
        %v1133 = vpop.f32.mrf.mxu0
        %1134 = vmatprep.mubr.f32.mxu0 %v788
        %1135 = vmatmul.mubr.f32.gmra.mxu0 %v787
        %v1136 = vpop.f32.mrf.mxu0
        %v1137 = vadd.f32 %v992, %v1136
        %v1138 = vpop.f32.mrf.mxu0
        %1139 = vmatprep.mubr.f32.mxu0 %v792
        %1140 = vmatmul.mubr.f32.gmra.mxu0 %v791
        %v1141 = vpop.f32.mrf.mxu0
        %v1142 = vadd.f32 %v997, %v1141
        %v1143 = vpop.f32.mrf.mxu0
        %1144 = vmatprep.mubr.f32.mxu0 %v796
        %1145 = vmatmul.mubr.f32.gmra.mxu0 %v795
        %v1146 = vpop.f32.mrf.mxu0
        %v1147 = vadd.f32 %v1002, %v1146
        %v1148 = vpop.f32.mrf.mxu0
        %1149 = vmatprep.mubr.f32.mxu0 %v800
        %1150 = vmatmul.mubr.f32.gmra.mxu0 %v799
        %v1151 = vpop.f32.mrf.mxu0
        %v1152 = vadd.f32 %v1007, %v1151
        %v1153 = vpop.f32.mrf.mxu0
        %1154 = vmatprep.mubr.f32.mxu0 %v804
        %1155 = vmatmul.mubr.f32.gmra.mxu0 %v803
        %v1156 = vpop.f32.mrf.mxu0
        %v1157 = vadd.f32 %v1012, %v1156
        %v1158 = vpop.f32.mrf.mxu0
        %1159 = vmatprep.mubr.f32.mxu0 %v808
        %1160 = vmatmul.mubr.f32.gmra.mxu0 %v807
        %v1161 = vpop.f32.mrf.mxu0
        %v1162 = vadd.f32 %v1017, %v1161
        %v1163 = vpop.f32.mrf.mxu0
        %1164 = vmatprep.mubr.f32.mxu0 %v812
        %1165 = vmatmul.mubr.f32.gmra.mxu0 %v811
        %v1166 = vpop.f32.mrf.mxu0
        %v1167 = vadd.f32 %v1022, %v1166
        %v1168 = vpop.f32.mrf.mxu0
        %1169 = vmatprep.mubr.f32.mxu0 %v816
        %1170 = vmatmul.mubr.f32.gmra.mxu0 %v815
        %v1171 = vpop.f32.mrf.mxu0
        %v1172 = vadd.f32 %v1027, %v1171
        %v1173 = vpop.f32.mrf.mxu0
        %1174 = vmatprep.mubr.f32.mxu0 %v820
        %1175 = vmatmul.mubr.f32.gmra.mxu0 %v819
        %v1176 = vpop.f32.mrf.mxu0
        %v1177 = vadd.f32 %v1032, %v1176
        %v1178 = vpop.f32.mrf.mxu0
        %1179 = vmatprep.mubr.f32.mxu0 %v824
        %1180 = vmatmul.mubr.f32.gmra.mxu0 %v823
        %v1181 = vpop.f32.mrf.mxu0
        %v1182 = vadd.f32 %v1037, %v1181
        %v1183 = vpop.f32.mrf.mxu0
        %1184 = vmatprep.mubr.f32.mxu0 %v828
        %1185 = vmatmul.mubr.f32.gmra.mxu0 %v827
        %v1186 = vpop.f32.mrf.mxu0
        %v1187 = vadd.f32 %v1042, %v1186
        %v1188 = vpop.f32.mrf.mxu0
        %1189 = vdwg.mxu0
        %v1190 = vadd.f32 %v1112, %v341
        %v1191 = vadd.f32 %v1117, %v342
        %v1192 = vadd.f32 %v1122, %v343
        %v1193 = vadd.f32 %v1127, %v344
        %v1194 = vadd.f32 %v1132, %v345
        %v1195 = vadd.f32 %v1137, %v346
        %v1196 = vadd.f32 %v1142, %v347
        %v1197 = vadd.f32 %v1147, %v348
        %v1198 = vadd.f32 %v1152, %v349
        %v1199 = vadd.f32 %v1157, %v350
        %v1200 = vadd.f32 %v1162, %v351
        %v1201 = vadd.f32 %v1167, %v352
        %v1202 = vadd.f32 %v1172, %v353
        %v1203 = vadd.f32 %v1177, %v354
        %v1204 = vadd.f32 %v1182, %v355
        %v1205 = vadd.f32 %v1187, %v356
        %v1206 = vld [vmem:[%s5] sm:$0x1]
        %v1207 = vld [vmem:[%s6] sm:$0x1]
        %1208 = vadd.xlane.f32.xlu0 %v1190
        %v1209 = vpop.xlane.xlu0 %1208
        %1210 = vadd.xlane.f32.xlu0 %v1191
        %v1211 = vpop.xlane.xlu0 %1210
        %1212 = vadd.xlane.f32.xlu0 %v1192
        %v1213 = vpop.xlane.xlu0 %1212
        %1214 = vadd.xlane.f32.xlu0 %v1193
        %v1215 = vpop.xlane.xlu0 %1214
        %1216 = vadd.xlane.f32.xlu0 %v1194
        %v1217 = vpop.xlane.xlu0 %1216
        %1218 = vadd.xlane.f32.xlu0 %v1195
        %v1219 = vpop.xlane.xlu0 %1218
        %1220 = vadd.xlane.f32.xlu0 %v1196
        %v1221 = vpop.xlane.xlu0 %1220
        %1222 = vadd.xlane.f32.xlu0 %v1197
        %v1223 = vpop.xlane.xlu0 %1222
        %1224 = vadd.xlane.f32.xlu0 %v1198
        %v1225 = vpop.xlane.xlu0 %1224
        %1226 = vadd.xlane.f32.xlu0 %v1199
        %v1227 = vpop.xlane.xlu0 %1226
        %1228 = vadd.xlane.f32.xlu0 %v1200
        %v1229 = vpop.xlane.xlu0 %1228
        %1230 = vadd.xlane.f32.xlu0 %v1201
        %v1231 = vpop.xlane.xlu0 %1230
        %1232 = vadd.xlane.f32.xlu0 %v1202
        %v1233 = vpop.xlane.xlu0 %1232
        %1234 = vadd.xlane.f32.xlu0 %v1203
        %v1235 = vpop.xlane.xlu0 %1234
        %1236 = vadd.xlane.f32.xlu0 %v1204
        %v1237 = vpop.xlane.xlu0 %1236
        %1238 = vadd.xlane.f32.xlu0 %v1205
        %v1239 = vpop.xlane.xlu0 %1238
        %v1240 = vrcp.pop 128.0
        %v1241 = vmul.f32 %v1209, %v1240
        %v1242 = vmul.f32 %v1211, %v1240
        %v1243 = vmul.f32 %v1213, %v1240
        %v1244 = vmul.f32 %v1215, %v1240
        %v1245 = vmul.f32 %v1217, %v1240
        %v1246 = vmul.f32 %v1219, %v1240
        %v1247 = vmul.f32 %v1221, %v1240
        %v1248 = vmul.f32 %v1223, %v1240
        %v1249 = vmul.f32 %v1225, %v1240
        %v1250 = vmul.f32 %v1227, %v1240
        %v1251 = vmul.f32 %v1229, %v1240
        %v1252 = vmul.f32 %v1231, %v1240
        %v1253 = vmul.f32 %v1233, %v1240
        %v1254 = vmul.f32 %v1235, %v1240
        %v1255 = vmul.f32 %v1237, %v1240
        %v1256 = vmul.f32 %v1239, %v1240
        %v1257 = vmul.f32 %v1190, %v1190
        %v1258 = vmul.f32 %v1191, %v1191
        %v1259 = vmul.f32 %v1192, %v1192
        %v1260 = vmul.f32 %v1193, %v1193
        %v1261 = vmul.f32 %v1194, %v1194
        %v1262 = vmul.f32 %v1195, %v1195
        %v1263 = vmul.f32 %v1196, %v1196
        %v1264 = vmul.f32 %v1197, %v1197
        %v1265 = vmul.f32 %v1198, %v1198
        %v1266 = vmul.f32 %v1199, %v1199
        %v1267 = vmul.f32 %v1200, %v1200
        %v1268 = vmul.f32 %v1201, %v1201
        %v1269 = vmul.f32 %v1202, %v1202
        %v1270 = vmul.f32 %v1203, %v1203
        %v1271 = vmul.f32 %v1204, %v1204
        %v1272 = vmul.f32 %v1205, %v1205
        %1273 = vadd.xlane.f32.xlu0 %v1257
        %v1274 = vpop.xlane.xlu0 %1273
        %1275 = vadd.xlane.f32.xlu0 %v1258
        %v1276 = vpop.xlane.xlu0 %1275
        %1277 = vadd.xlane.f32.xlu0 %v1259
        %v1278 = vpop.xlane.xlu0 %1277
        %1279 = vadd.xlane.f32.xlu0 %v1260
        %v1280 = vpop.xlane.xlu0 %1279
        %1281 = vadd.xlane.f32.xlu0 %v1261
        %v1282 = vpop.xlane.xlu0 %1281
        %1283 = vadd.xlane.f32.xlu0 %v1262
        %v1284 = vpop.xlane.xlu0 %1283
        %1285 = vadd.xlane.f32.xlu0 %v1263
        %v1286 = vpop.xlane.xlu0 %1285
        %1287 = vadd.xlane.f32.xlu0 %v1264
        %v1288 = vpop.xlane.xlu0 %1287
        %1289 = vadd.xlane.f32.xlu0 %v1265
        %v1290 = vpop.xlane.xlu0 %1289
        %1291 = vadd.xlane.f32.xlu0 %v1266
        %v1292 = vpop.xlane.xlu0 %1291
        %1293 = vadd.xlane.f32.xlu0 %v1267
        %v1294 = vpop.xlane.xlu0 %1293
        %1295 = vadd.xlane.f32.xlu0 %v1268
        %v1296 = vpop.xlane.xlu0 %1295
        %1297 = vadd.xlane.f32.xlu0 %v1269
        %v1298 = vpop.xlane.xlu0 %1297
        %1299 = vadd.xlane.f32.xlu0 %v1270
        %v1300 = vpop.xlane.xlu0 %1299
        %1301 = vadd.xlane.f32.xlu0 %v1271
        %v1302 = vpop.xlane.xlu0 %1301
        %1303 = vadd.xlane.f32.xlu0 %v1272
        %v1304 = vpop.xlane.xlu0 %1303
        %v1305 = vmul.f32 %v1274, %v1240
        %v1306 = vmul.f32 %v1276, %v1240
        %v1307 = vmul.f32 %v1278, %v1240
        %v1308 = vmul.f32 %v1280, %v1240
        %v1309 = vmul.f32 %v1282, %v1240
        %v1310 = vmul.f32 %v1284, %v1240
        %v1311 = vmul.f32 %v1286, %v1240
        %v1312 = vmul.f32 %v1288, %v1240
        %v1313 = vmul.f32 %v1290, %v1240
        %v1314 = vmul.f32 %v1292, %v1240
        %v1315 = vmul.f32 %v1294, %v1240
        %v1316 = vmul.f32 %v1296, %v1240
        %v1317 = vmul.f32 %v1298, %v1240
        %v1318 = vmul.f32 %v1300, %v1240
        %v1319 = vmul.f32 %v1302, %v1240
        %v1320 = vmul.f32 %v1304, %v1240
        %v1321 = vmul.f32 %v1241, %v1241
        %v1322 = vmul.f32 %v1242, %v1242
        %v1323 = vmul.f32 %v1243, %v1243
        %v1324 = vmul.f32 %v1244, %v1244
        %v1325 = vmul.f32 %v1245, %v1245
        %v1326 = vmul.f32 %v1246, %v1246
        %v1327 = vmul.f32 %v1247, %v1247
        %v1328 = vmul.f32 %v1248, %v1248
        %v1329 = vmul.f32 %v1249, %v1249
        %v1330 = vmul.f32 %v1250, %v1250
        %v1331 = vmul.f32 %v1251, %v1251
        %v1332 = vmul.f32 %v1252, %v1252
        %v1333 = vmul.f32 %v1253, %v1253
        %v1334 = vmul.f32 %v1254, %v1254
        %v1335 = vmul.f32 %v1255, %v1255
        %v1336 = vmul.f32 %v1256, %v1256
        %v1337 = vsub.f32 %v1305, %v1321
        %v1338 = vsub.f32 %v1306, %v1322
        %v1339 = vsub.f32 %v1307, %v1323
        %v1340 = vsub.f32 %v1308, %v1324
        %v1341 = vsub.f32 %v1309, %v1325
        %v1342 = vsub.f32 %v1310, %v1326
        %v1343 = vsub.f32 %v1311, %v1327
        %v1344 = vsub.f32 %v1312, %v1328
        %v1345 = vsub.f32 %v1313, %v1329
        %v1346 = vsub.f32 %v1314, %v1330
        %v1347 = vsub.f32 %v1315, %v1331
        %v1348 = vsub.f32 %v1316, %v1332
        %v1349 = vsub.f32 %v1317, %v1333
        %v1350 = vsub.f32 %v1318, %v1334
        %v1351 = vsub.f32 %v1319, %v1335
        %v1352 = vsub.f32 %v1320, %v1336
        %v1353 = vmax.f32 %v1337, 0.0
        %v1354 = vmax.f32 %v1338, 0.0
        %v1355 = vmax.f32 %v1339, 0.0
        %v1356 = vmax.f32 %v1340, 0.0
        %v1357 = vmax.f32 %v1341, 0.0
        %v1358 = vmax.f32 %v1342, 0.0
        %v1359 = vmax.f32 %v1343, 0.0
        %v1360 = vmax.f32 %v1344, 0.0
        %v1361 = vmax.f32 %v1345, 0.0
        %v1362 = vmax.f32 %v1346, 0.0
        %v1363 = vmax.f32 %v1347, 0.0
        %v1364 = vmax.f32 %v1348, 0.0
        %v1365 = vmax.f32 %v1349, 0.0
        %v1366 = vmax.f32 %v1350, 0.0
        %v1367 = vmax.f32 %v1351, 0.0
        %v1368 = vmax.f32 %v1352, 0.0
        %v1369 = vadd.f32 %v1353, 1e-05
        %v1370 = vadd.f32 %v1354, 1e-05
        %v1371 = vadd.f32 %v1355, 1e-05
        %v1372 = vadd.f32 %v1356, 1e-05
        %v1373 = vadd.f32 %v1357, 1e-05
        %v1374 = vadd.f32 %v1358, 1e-05
        %v1375 = vadd.f32 %v1359, 1e-05
        %v1376 = vadd.f32 %v1360, 1e-05
        %v1377 = vadd.f32 %v1361, 1e-05
        %v1378 = vadd.f32 %v1362, 1e-05
        %v1379 = vadd.f32 %v1363, 1e-05
        %v1380 = vadd.f32 %v1364, 1e-05
        %v1381 = vadd.f32 %v1365, 1e-05
        %v1382 = vadd.f32 %v1366, 1e-05
        %v1383 = vadd.f32 %v1367, 1e-05
        %v1384 = vadd.f32 %v1368, 1e-05
        %v1385 = vrsqrt.pop %v1369
        %v1386 = vrsqrt.pop %v1370
        %v1387 = vrsqrt.pop %v1371
        %v1388 = vrsqrt.pop %v1372
        %v1389 = vrsqrt.pop %v1373
        %v1390 = vrsqrt.pop %v1374
        %v1391 = vrsqrt.pop %v1375
        %v1392 = vrsqrt.pop %v1376
        %v1393 = vrsqrt.pop %v1377
        %v1394 = vrsqrt.pop %v1378
        %v1395 = vrsqrt.pop %v1379
        %v1396 = vrsqrt.pop %v1380
        %v1397 = vrsqrt.pop %v1381
        %v1398 = vrsqrt.pop %v1382
        %v1399 = vrsqrt.pop %v1383
        %v1400 = vrsqrt.pop %v1384
        %v1401 = vsub.f32 %v1190, %v1241
        %v1402 = vsub.f32 %v1191, %v1242
        %v1403 = vsub.f32 %v1192, %v1243
        %v1404 = vsub.f32 %v1193, %v1244
        %v1405 = vsub.f32 %v1194, %v1245
        %v1406 = vsub.f32 %v1195, %v1246
        %v1407 = vsub.f32 %v1196, %v1247
        %v1408 = vsub.f32 %v1197, %v1248
        %v1409 = vsub.f32 %v1198, %v1249
        %v1410 = vsub.f32 %v1199, %v1250
        %v1411 = vsub.f32 %v1200, %v1251
        %v1412 = vsub.f32 %v1201, %v1252
        %v1413 = vsub.f32 %v1202, %v1253
        %v1414 = vsub.f32 %v1203, %v1254
        %v1415 = vsub.f32 %v1204, %v1255
        %v1416 = vsub.f32 %v1205, %v1256
        %v1417 = vmul.f32 %v1401, %v1385
        %v1418 = vmul.f32 %v1402, %v1386
        %v1419 = vmul.f32 %v1403, %v1387
        %v1420 = vmul.f32 %v1404, %v1388
        %v1421 = vmul.f32 %v1405, %v1389
        %v1422 = vmul.f32 %v1406, %v1390
        %v1423 = vmul.f32 %v1407, %v1391
        %v1424 = vmul.f32 %v1408, %v1392
        %v1425 = vmul.f32 %v1409, %v1393
        %v1426 = vmul.f32 %v1410, %v1394
        %v1427 = vmul.f32 %v1411, %v1395
        %v1428 = vmul.f32 %v1412, %v1396
        %v1429 = vmul.f32 %v1413, %v1397
        %v1430 = vmul.f32 %v1414, %v1398
        %v1431 = vmul.f32 %v1415, %v1399
        %v1432 = vmul.f32 %v1416, %v1400
        %v1434 = vlaneseq
        %v1435 = vshrl.u32 %v1434, 7
        %v1436 = vsub.s32 0, %v1435
        %v1437 = vrot.slane %v1206, %v1436
        %v1439 = vmul.f32 %v1417, %v1437
        %v1440 = vmul.f32 %v1418, %v1437
        %v1441 = vmul.f32 %v1419, %v1437
        %v1442 = vmul.f32 %v1420, %v1437
        %v1443 = vmul.f32 %v1421, %v1437
        %v1444 = vmul.f32 %v1422, %v1437
        %v1445 = vmul.f32 %v1423, %v1437
        %v1446 = vmul.f32 %v1424, %v1437
        %v1447 = vmul.f32 %v1425, %v1437
        %v1448 = vmul.f32 %v1426, %v1437
        %v1449 = vmul.f32 %v1427, %v1437
        %v1450 = vmul.f32 %v1428, %v1437
        %v1451 = vmul.f32 %v1429, %v1437
        %v1452 = vmul.f32 %v1430, %v1437
        %v1453 = vmul.f32 %v1431, %v1437
        %v1454 = vmul.f32 %v1432, %v1437
        %v1456 = vlaneseq
        %v1457 = vshrl.u32 %v1456, 7
        %v1458 = vsub.s32 0, %v1457
        %v1459 = vrot.slane %v1207, %v1458
        %v1461 = vadd.f32 %v1439, %v1459
        %v1462 = vadd.f32 %v1440, %v1459
        %v1463 = vadd.f32 %v1441, %v1459
        %v1464 = vadd.f32 %v1442, %v1459
        %v1465 = vadd.f32 %v1443, %v1459
        %v1466 = vadd.f32 %v1444, %v1459
        %v1467 = vadd.f32 %v1445, %v1459
        %v1468 = vadd.f32 %v1446, %v1459
        %v1469 = vadd.f32 %v1447, %v1459
        %v1470 = vadd.f32 %v1448, %v1459
        %v1471 = vadd.f32 %v1449, %v1459
        %v1472 = vadd.f32 %v1450, %v1459
        %v1473 = vadd.f32 %v1451, %v1459
        %v1474 = vadd.f32 %v1452, %v1459
        %v1475 = vadd.f32 %v1453, %v1459
        %v1476 = vadd.f32 %v1454, %v1459
        %1477 = vst [vmem:[%s338] sm:$0xff] %v1461
        %1478 = vst [vmem:[%s338 + $0x8] sm:$0xff] %v1462
        %1479 = vst [vmem:[%s338 + $0x10] sm:$0xff] %v1463
        %1480 = vst [vmem:[%s338 + $0x18] sm:$0xff] %v1464
        %1481 = vst [vmem:[%s338 + $0x20] sm:$0xff] %v1465
        %1482 = vst [vmem:[%s338 + $0x28] sm:$0xff] %v1466
        %1483 = vst [vmem:[%s338 + $0x30] sm:$0xff] %v1467
        %1484 = vst [vmem:[%s338 + $0x38] sm:$0xff] %v1468
        %1485 = vst [vmem:[%s338 + $0x40] sm:$0xff] %v1469
        %1486 = vst [vmem:[%s338 + $0x48] sm:$0xff] %v1470
        %1487 = vst [vmem:[%s338 + $0x50] sm:$0xff] %v1471
        %1488 = vst [vmem:[%s338 + $0x58] sm:$0xff] %v1472
        %1489 = vst [vmem:[%s338 + $0x60] sm:$0xff] %v1473
        %1490 = vst [vmem:[%s338 + $0x68] sm:$0xff] %v1474
        %1491 = vst [vmem:[%s338 + $0x70] sm:$0xff] %v1475
        %1492 = vst [vmem:[%s338 + $0x78] sm:$0xff] %v1476
        %s1493 = sand.u32 %s186, 1
        %s1494 = scalar_lea.sflag [#allocation4], %s1493
        %s1495 = sand.u32 %s186, 1
        %s1496 = smul.addr %s1495, 128
        %s1497 = scalar_lea.vmem [#allocation10], %s1496
        // Predicated region
        $region65: #{tpu_custom_call.1} parent=47 // pred_check
          %p1498 = pneg %p196
        $region66: #{tpu_custom_call.1} parent=47 // pred_check_branch
          %1500 = sbr.rel (%p1498) target = $region68
        $region67: #{tpu_custom_call.1} parent=47 // pred_region
          %s1501 = smul.u32 16, %s26
          %s1503 = ssub.s32 2048, 2048
          %1504 = vsyncadd %s1494, %s1503
          %s1505 = smul.addr %s1501, 128
          %s1506 = scalar_lea.hbm %s7, %s1505
          %s1507 = sshll.u32 %s1497, 4
          %s1508 = int_to_ptr.vmem [resolvable:$true] %s1507
          %1513 = dma.vmem_to_hbm [thread:$0]  %s1508, 2048, %s1506, %s1494, 128, 128, 8
        $region68: #{tpu_custom_call.1} parent=47 // pred_fallthru
          _
      $region48: #{tpu_custom_call.1} parent=5 // pred_fallthru
        _
      %p1514 = scmp.le.s32.totalorder 2, %s21
      // Predicated region
      $region69: #{tpu_custom_call.1} parent=5 // pred_check
        %p1515 = pneg %p1514
      $region70: #{tpu_custom_call.1} parent=5 // pred_check_branch
        %1517 = sbr.rel (%p1515) target = $region72
      $region71: #{tpu_custom_call.1} parent=5 // pred_region
        %s1518 = ssub.s32 %s21, 2
        // Predicated region
        $region73: #{tpu_custom_call.1} parent=71 // pred_check
          %p1519 = pneg %p202
        $region74: #{tpu_custom_call.1} parent=71 // pred_check_branch
          %1521 = sbr.rel (%p1519) target = $region76
        $region75: #{tpu_custom_call.1} parent=71 // pred_region
          %s1522 = sand.u32 %s187, 1
          %s1523 = scalar_lea.sflag [#allocation4], %s1522
          %s1524 = sand.u32 %s187, 1
          %s1525 = smul.addr %s1524, 128
          %s1526 = scalar_lea.vmem [#allocation10], %s1525
          %1527 = dma.done %s1523, 2048
        $region76: #{tpu_custom_call.1} parent=71 // pred_fallthru
          _
      $region72: #{tpu_custom_call.1} parent=5 // pred_fallthru
        _
    $region6: #{tpu_custom_call.1} parent=1 // loop_footer
      %s25 = sadd.s32 1, %s21
    $region7: #{tpu_custom_call.1} parent=1 // loop_footer_branch
      %20 = sbr.rel target = $region3
    $region8: #{tpu_custom_call.1} parent=1 // loop_exit
      _
    %1528 = vsyncpa [#allocation3], 1
    %s1529 = scalar_lea.sflag [#allocation3], 1
    %1530 = vsyncpa %s1529, 1
    %1531 = vsyncpa [#allocation6], 1
    %1532 = vsyncpa [#allocation9], 1
    %1533 = vsyncpa [#allocation4], 1
    %s1534 = scalar_lea.sflag [#allocation4], 1
    %1535 = vsyncpa %s1534, 1

</llo_original>
